<compile_context>
chip_gen: v5e
topology: v5e:2x2
jax: 0.10.0
libtpu: 0.0.40
codegen_flags: <defaults>
</compile_context>

<pallas_src>
import jax
import jax.numpy as jnp
from jax.experimental import pallas as pl
from jax.experimental.pallas import tpu as pltpu

STATE_SIZE = 4
FC1_UNIT = 1024
FC2_UNIT = 256
N_ACTIONS = 2
A_PAD = 8  # actions padded 2 -> 8 so the output block is sublane-aligned (8, TB)


def _round_up(x, m):
    return (x + m - 1) // m * m


# -----------------------------------------------------------------------------
# Kernel 1: one-shot build of the transposed Q table qT[a, s].
# Weights are in PyTorch layout (W[out, in]) so the table comes out transposed
# for free:
#   t1[j, s] = relu(W1[j, s] + b1[j])                 (== relu(fc1(one_hot(s+1))))
#   t2[k, s] = relu(sum_j W2[k, j] * t1[j, s] + b2[k])
#   qT[a, s] =       sum_k W3p[a, k] * t2[k, s] + b3p[a]
# -----------------------------------------------------------------------------
def _qtable_kernel(w1_ref, b1_ref, w2_ref, b2_ref, w3p_ref, b3p_ref, qt_ref):
    t1 = jnp.maximum(w1_ref[...] + b1_ref[...], 0.0)                        # [FC1, 4]
    t2 = jnp.dot(w2_ref[...], t1, preferred_element_type=jnp.float32) + b2_ref[...]
    t2 = jnp.maximum(t2, 0.0)                                               # [FC2, 4]
    qt_ref[...] = (jnp.dot(w3p_ref[...], t2, preferred_element_type=jnp.float32)
                   + b3p_ref[...])                                          # [A_PAD, 4]


def precompute_q_table(params):
    """Builds qT[a, s] (shape [A_PAD, STATE_SIZE]; rows >= N_ACTIONS are zero).

    Call once per parameter set and pass it to qnetwork_forward via q_table=
    to amortize all weight traffic across repeated inference calls.
    """
    w1, b1, w2, b2, w3, b3 = params
    b1c = b1.reshape(FC1_UNIT, 1).astype(jnp.float32)
    b2c = b2.reshape(FC2_UNIT, 1).astype(jnp.float32)
    w3p = jnp.zeros((A_PAD, FC2_UNIT), jnp.float32).at[:N_ACTIONS, :].set(w3)
    b3p = jnp.zeros((A_PAD, 1), jnp.float32).at[:N_ACTIONS, 0].set(b3)
    return pl.pallas_call(
        _qtable_kernel,
        out_shape=jax.ShapeDtypeStruct((A_PAD, STATE_SIZE), jnp.float32),
    )(w1.astype(jnp.float32), b1c, w2.astype(jnp.float32), b2c, w3p, b3p)


# -----------------------------------------------------------------------------
# Kernel 2: batched LUT gather on the VPU.
#   out[a, b] = qT[a, state[b] - 1]
# states arrive as a lane-dense [1, TB] row; output is lane-dense [A_PAD, TB].
# -----------------------------------------------------------------------------
def _gather_kernel(s_ref, qt_ref, o_ref):
    idx = s_ref[...]                                        # [1, TB] int32 (1..4)
    qt = qt_ref[...]                                        # [A_PAD, 4]
    acc = jnp.zeros(o_ref.shape, jnp.float32)               # [A_PAD, TB]
    for k in range(STATE_SIZE):                             # unrolled: 4 cmp+select
        mask = jnp.broadcast_to(idx == (k + 1), o_ref.shape)        # sublane bcast
        col = jnp.broadcast_to(qt[:, k:k + 1], o_ref.shape)         # lane bcast
        acc = jnp.where(mask, col, acc)
    o_ref[...] = acc                                        # unmasked full-lane vst


def qnetwork_forward(states, params=None, *, q_table=None, block_b=8192):
    """states: [B, 1] (or [B]) integer states in 1..STATE_SIZE.

    Returns Q-values [B, 2] float32.  Pass q_table=precompute_q_table(params)
    to skip rebuilding the table on every call.
    """
    if q_table is None:
        q_table = precompute_q_table(params)

    s = jnp.asarray(states).astype(jnp.int32).reshape(-1)
    B = s.shape[0]

    # Lane-aligned batch tile (multiple of 128 regardless of caller's block_b).
    TB = _round_up(max(1, min(block_b, B)), 128)
    B_pad = _round_up(B, TB)
    if B_pad != B:
        s = jnp.concatenate([s, jnp.ones((B_pad - B,), jnp.int32)], axis=0)
    s = s.reshape(1, B_pad)                                 # lane-dense state row

    out_t = pl.pallas_call(
        _gather_kernel,
        out_shape=jax.ShapeDtypeStruct((A_PAD, B_pad), jnp.float32),
        grid=(B_pad // TB,),
        in_specs=[
            pl.BlockSpec((1, TB), lambda i: (0, i)),                  # states
            pl.BlockSpec((A_PAD, STATE_SIZE), lambda i: (0, 0)),      # q table (resident)
        ],
        out_specs=pl.BlockSpec((A_PAD, TB), lambda i: (0, i)),        # lane-dense store
        compiler_params=pltpu.CompilerParams(
            dimension_semantics=("parallel",)),
    )(s, q_table)

    return out_t[:N_ACTIONS, :B].T                          # [B, 2]


def init_params(key):
    """Deterministic init matching nn.Linear's U(-1/sqrt(fan_in), 1/sqrt(fan_in)).

    Weights are kept in PyTorch layout: W[out_features, in_features], b[out].
    """
    ks = jax.random.split(key, 6)

    def linear(kw, kb, fan_in, fan_out):
        bound = 1.0 / (fan_in ** 0.5)
        w = jax.random.uniform(kw, (fan_out, fan_in), jnp.float32, -bound, bound)
        b = jax.random.uniform(kb, (fan_out,), jnp.float32, -bound, bound)
        return w, b

    w1, b1 = linear(ks[0], ks[1], STATE_SIZE, FC1_UNIT)
    w2, b2 = linear(ks[2], ks[3], FC1_UNIT, FC2_UNIT)
    w3, b3 = linear(ks[4], ks[5], FC2_UNIT, N_ACTIONS)
    return (w1, b1, w2, b2, w3, b3)


def reference_forward(states, params):
    """Pure-JAX reference mirroring the PyTorch forward (PyTorch weight layout)."""
    w1, b1, w2, b2, w3, b3 = params
    x = jax.nn.one_hot(jnp.asarray(states).astype(jnp.int32).reshape(-1) - 1,
                       STATE_SIZE, dtype=jnp.float32)
    h1 = jax.nn.relu(x @ w1.T + b1)
    h2 = jax.nn.relu(h1 @ w2.T + b2)
    return h2 @ w3.T + b3


if __name__ == "__main__":
    key = jax.random.PRNGKey(0)
    pkey, skey = jax.random.split(key)

    params = init_params(pkey)

    B = 8
    # states in {1, ..., STATE_SIZE}, shape [B, 1] like the PyTorch module expects
    states = jax.random.randint(skey, (B, 1), 1, STATE_SIZE + 1, dtype=jnp.int32)

    # Path 1: table built inside the call.
    q = jax.block_until_ready(qnetwork_forward(states, params))
    q_ref = reference_forward(states, params)
    assert q.shape == (B, N_ACTIONS)
    assert jnp.allclose(q, q_ref, atol=1e-4, rtol=1e-4), (q, q_ref)

    # Path 2: cached table + ragged batch (exercises the pad-to-tile path).
    qt = jax.block_until_ready(precompute_q_table(params))
    B2 = 5
    states2 = states[:B2]
    q2 = jax.block_until_ready(qnetwork_forward(states2, q_table=qt))
    assert q2.shape == (B2, N_ACTIONS)
    assert jnp.allclose(q2, reference_forward(states2, params), atol=1e-4, rtol=1e-4)

    print("KERNEL_OK")
</pallas_src>

<mosaic_0001>
module attributes {stable_mosaic.version = 11 : i64} {
  func.func @_qtable_kernel(%arg0: memref<1024x4xf32, #tpu.memory_space<vmem>>, %arg1: memref<1024x1xf32, #tpu.memory_space<vmem>>, %arg2: memref<256x1024xf32, #tpu.memory_space<vmem>>, %arg3: memref<256x1xf32, #tpu.memory_space<vmem>>, %arg4: memref<8x256xf32, #tpu.memory_space<vmem>>, %arg5: memref<8x1xf32, #tpu.memory_space<vmem>>, %arg6: memref<8x4xf32, #tpu.memory_space<vmem>>) attributes {dimension_semantics = [], scalar_prefetch = 0 : i64, scratch_operands = 0 : i64, tpu.core_type = #tpu.core_type<tc>} {
    %c0 = arith.constant 0 : index
    %c0_0 = arith.constant 0 : index
    %0 = vector.load %arg0[%c0, %c0_0] : memref<1024x4xf32, #tpu.memory_space<vmem>>, vector<1024x4xf32>
    %c0_1 = arith.constant 0 : index
    %c0_2 = arith.constant 0 : index
    %1 = vector.load %arg1[%c0_1, %c0_2] : memref<1024x1xf32, #tpu.memory_space<vmem>>, vector<1024x1xf32>
    %2 = vector.broadcast %1 : vector<1024x1xf32> to vector<1024x4xf32>
    %3 = arith.addf %0, %2 : vector<1024x4xf32>
    %cst = arith.constant 0.000000e+00 : f32
    %4 = vector.broadcast %cst : f32 to vector<1024x4xf32>
    %5 = arith.maximumf %3, %4 : vector<1024x4xf32>
    %c0_3 = arith.constant 0 : index
    %c0_4 = arith.constant 0 : index
    %6 = vector.load %arg2[%c0_3, %c0_4] : memref<256x1024xf32, #tpu.memory_space<vmem>>, vector<256x1024xf32>
    %cst_5 = arith.constant dense<0.000000e+00> : vector<256x4xf32>
    %7 = tpu.matmul %6, %5, %cst_5 {dimension_numbers = #tpu.dot_dimension_numbers<[1], [0], [0], [1], [0, 0, 1, 1], [], []>} : vector<256x1024xf32>, vector<1024x4xf32>, vector<256x4xf32> -> vector<256x4xf32>
    %c0_6 = arith.constant 0 : index
    %c0_7 = arith.constant 0 : index
    %8 = vector.load %arg3[%c0_6, %c0_7] : memref<256x1xf32, #tpu.memory_space<vmem>>, vector<256x1xf32>
    %9 = vector.broadcast %8 : vector<256x1xf32> to vector<256x4xf32>
    %10 = arith.addf %7, %9 : vector<256x4xf32>
    %cst_8 = arith.constant 0.000000e+00 : f32
    %11 = vector.broadcast %cst_8 : f32 to vector<256x4xf32>
    %12 = arith.maximumf %10, %11 : vector<256x4xf32>
    %c0_9 = arith.constant 0 : index
    %c0_10 = arith.constant 0 : index
    %13 = vector.load %arg4[%c0_9, %c0_10] : memref<8x256xf32, #tpu.memory_space<vmem>>, vector<8x256xf32>
    %cst_11 = arith.constant dense<0.000000e+00> : vector<8x4xf32>
    %14 = tpu.matmul %13, %12, %cst_11 {dimension_numbers = #tpu.dot_dimension_numbers<[1], [0], [0], [1], [0, 0, 1, 1], [], []>} : vector<8x256xf32>, vector<256x4xf32>, vector<8x4xf32> -> vector<8x4xf32>
    %c0_12 = arith.constant 0 : index
    %c0_13 = arith.constant 0 : index
    %15 = vector.load %arg5[%c0_12, %c0_13] : memref<8x1xf32, #tpu.memory_space<vmem>>, vector<8x1xf32>
    %16 = vector.broadcast %15 : vector<8x1xf32> to vector<8x4xf32>
    %17 = arith.addf %14, %16 : vector<8x4xf32>
    %c0_14 = arith.constant 0 : index
    %c0_15 = arith.constant 0 : index
    %18 = vector.load %arg6[%c0_14, %c0_15] : memref<8x4xf32, #tpu.memory_space<vmem>>, vector<8x4xf32>
    tpu.vector_store %arg6[%c0_14, %c0_15], %17 {strides = array<i32>} : memref<8x4xf32, #tpu.memory_space<vmem>>, vector<8x4xf32>,
    return
  }
}

</mosaic_0001>

<llo_original>
// kernel: tpu_custom_call.1
$region0: #{tpu_custom_call.1}
  #allocation0 [shape = 'u32[]', space=smem, size = 0x4, offset = 0x4, fixed_abs, tag = 'smem constant byte address 0x4 - core index']
  #allocation1 [shape = 'u32[72,128]{1,0:T(1,128)}', space=vmem, size = 0x9000, scoped, tag = 'internal scratch']
  %s0 = inlined_call_operand.vmem [shape: f32[1024,4], index: 0, kind: input, shape index: {}]
  %s1 = inlined_call_operand.vmem [shape: f32[1024,1], index: 1, kind: input, shape index: {}]
  %s2 = inlined_call_operand.vmem [shape: f32[256,1024], index: 2, kind: input, shape index: {}]
  %s3 = inlined_call_operand.vmem [shape: f32[256,1], index: 3, kind: input, shape index: {}]
  %s4 = inlined_call_operand.vmem [shape: f32[8,256], index: 4, kind: input, shape index: {}]
  %s5 = inlined_call_operand.vmem [shape: f32[8,1], index: 5, kind: input, shape index: {}]
  %s6 = inlined_call_operand.vmem [shape: f32[8,4], index: 6, kind: output, shape index: {}]
  %s7 = sld [smem:[#allocation0]]
  $region34: #{tpu_custom_call.1} parent=0
    _
  %s9 = ssub.s32 1, %s7
  %s10 = scalar_select 0, %s9, %s7
  // Predicated region
  $region2: #{tpu_custom_call.1} parent=0 // pred_check
    _
  $region3: #{tpu_custom_call.1} parent=0 // pred_check_branch
    %12 = sbr.rel (0) target = $region5
  $region4: #{tpu_custom_call.1} parent=0 // pred_region
    _
  $region5: #{tpu_custom_call.1} parent=0 // pred_fallthru
    _
  // Predicated region
  $region6: #{tpu_custom_call.1} parent=0 // pred_check
    _
  $region7: #{tpu_custom_call.1} parent=0 // pred_check_branch
    %14 = sbr.rel (0) target = $region9
  $region8: #{tpu_custom_call.1} parent=0 // pred_region
    _
  $region9: #{tpu_custom_call.1} parent=0 // pred_fallthru
    _
  // Predicated region
  $region10: #{tpu_custom_call.1} parent=0 // pred_check
    _
  $region11: #{tpu_custom_call.1} parent=0 // pred_check_branch
    %16 = sbr.rel (0) target = $region13
  $region12: #{tpu_custom_call.1} parent=0 // pred_region
    _
  $region13: #{tpu_custom_call.1} parent=0 // pred_fallthru
    _
  // Predicated region
  $region14: #{tpu_custom_call.1} parent=0 // pred_check
    _
  $region15: #{tpu_custom_call.1} parent=0 // pred_check_branch
    %18 = sbr.rel (0) target = $region17
  $region16: #{tpu_custom_call.1} parent=0 // pred_region
    _
  $region17: #{tpu_custom_call.1} parent=0 // pred_fallthru
    _
  // Predicated region
  $region18: #{tpu_custom_call.1} parent=0 // pred_check
    _
  $region19: #{tpu_custom_call.1} parent=0 // pred_check_branch
    %20 = sbr.rel (0) target = $region21
  $region20: #{tpu_custom_call.1} parent=0 // pred_region
    _
  $region21: #{tpu_custom_call.1} parent=0 // pred_fallthru
    _
  // Predicated region
  $region22: #{tpu_custom_call.1} parent=0 // pred_check
    _
  $region23: #{tpu_custom_call.1} parent=0 // pred_check_branch
    %22 = sbr.rel (0) target = $region25
  $region24: #{tpu_custom_call.1} parent=0 // pred_region
    _
  $region25: #{tpu_custom_call.1} parent=0 // pred_fallthru
    _
  %v23 = vld [vmem:[%s0] sm:$0xff]
  %v24 = vld [vmem:[%s0 + $0x8] sm:$0xff]
  %v25 = vld [vmem:[%s0 + $0x10] sm:$0xff]
  %v26 = vld [vmem:[%s0 + $0x18] sm:$0xff]
  %v27 = vld [vmem:[%s0 + $0x20] sm:$0xff]
  %v28 = vld [vmem:[%s0 + $0x28] sm:$0xff]
  %v29 = vld [vmem:[%s0 + $0x30] sm:$0xff]
  %v30 = vld [vmem:[%s0 + $0x38] sm:$0xff]
  %v31 = vld [vmem:[%s0 + $0x40] sm:$0xff]
  %v32 = vld [vmem:[%s0 + $0x48] sm:$0xff]
  %v33 = vld [vmem:[%s0 + $0x50] sm:$0xff]
  %v34 = vld [vmem:[%s0 + $0x58] sm:$0xff]
  %v35 = vld [vmem:[%s0 + $0x60] sm:$0xff]
  %v36 = vld [vmem:[%s0 + $0x68] sm:$0xff]
  %v37 = vld [vmem:[%s0 + $0x70] sm:$0xff]
  %v38 = vld [vmem:[%s0 + $0x78] sm:$0xff]
  %v39 = vld [vmem:[%s0 + $0x80] sm:$0xff]
  %v40 = vld [vmem:[%s0 + $0x88] sm:$0xff]
  %v41 = vld [vmem:[%s0 + $0x90] sm:$0xff]
  %v42 = vld [vmem:[%s0 + $0x98] sm:$0xff]
  %v43 = vld [vmem:[%s0 + $0xa0] sm:$0xff]
  %v44 = vld [vmem:[%s0 + $0xa8] sm:$0xff]
  %v45 = vld [vmem:[%s0 + $0xb0] sm:$0xff]
  %v46 = vld [vmem:[%s0 + $0xb8] sm:$0xff]
  %v47 = vld [vmem:[%s0 + $0xc0] sm:$0xff]
  %v48 = vld [vmem:[%s0 + $0xc8] sm:$0xff]
  %v49 = vld [vmem:[%s0 + $0xd0] sm:$0xff]
  %v50 = vld [vmem:[%s0 + $0xd8] sm:$0xff]
  %v51 = vld [vmem:[%s0 + $0xe0] sm:$0xff]
  %v52 = vld [vmem:[%s0 + $0xe8] sm:$0xff]
  %v53 = vld [vmem:[%s0 + $0xf0] sm:$0xff]
  %v54 = vld [vmem:[%s0 + $0xf8] sm:$0xff]
  %v55 = vld [vmem:[%s0 + $0x100] sm:$0xff]
  %v56 = vld [vmem:[%s0 + $0x108] sm:$0xff]
  %v57 = vld [vmem:[%s0 + $0x110] sm:$0xff]
  %v58 = vld [vmem:[%s0 + $0x118] sm:$0xff]
  %v59 = vld [vmem:[%s0 + $0x120] sm:$0xff]
  %v60 = vld [vmem:[%s0 + $0x128] sm:$0xff]
  %v61 = vld [vmem:[%s0 + $0x130] sm:$0xff]
  %v62 = vld [vmem:[%s0 + $0x138] sm:$0xff]
  %v63 = vld [vmem:[%s0 + $0x140] sm:$0xff]
  %v64 = vld [vmem:[%s0 + $0x148] sm:$0xff]
  %v65 = vld [vmem:[%s0 + $0x150] sm:$0xff]
  %v66 = vld [vmem:[%s0 + $0x158] sm:$0xff]
  %v67 = vld [vmem:[%s0 + $0x160] sm:$0xff]
  %v68 = vld [vmem:[%s0 + $0x168] sm:$0xff]
  %v69 = vld [vmem:[%s0 + $0x170] sm:$0xff]
  %v70 = vld [vmem:[%s0 + $0x178] sm:$0xff]
  %v71 = vld [vmem:[%s0 + $0x180] sm:$0xff]
  %v72 = vld [vmem:[%s0 + $0x188] sm:$0xff]
  %v73 = vld [vmem:[%s0 + $0x190] sm:$0xff]
  %v74 = vld [vmem:[%s0 + $0x198] sm:$0xff]
  %v75 = vld [vmem:[%s0 + $0x1a0] sm:$0xff]
  %v76 = vld [vmem:[%s0 + $0x1a8] sm:$0xff]
  %v77 = vld [vmem:[%s0 + $0x1b0] sm:$0xff]
  %v78 = vld [vmem:[%s0 + $0x1b8] sm:$0xff]
  %v79 = vld [vmem:[%s0 + $0x1c0] sm:$0xff]
  %v80 = vld [vmem:[%s0 + $0x1c8] sm:$0xff]
  %v81 = vld [vmem:[%s0 + $0x1d0] sm:$0xff]
  %v82 = vld [vmem:[%s0 + $0x1d8] sm:$0xff]
  %v83 = vld [vmem:[%s0 + $0x1e0] sm:$0xff]
  %v84 = vld [vmem:[%s0 + $0x1e8] sm:$0xff]
  %v85 = vld [vmem:[%s0 + $0x1f0] sm:$0xff]
  %v86 = vld [vmem:[%s0 + $0x1f8] sm:$0xff]
  %v87 = vld [vmem:[%s0 + $0x200] sm:$0xff]
  %v88 = vld [vmem:[%s0 + $0x208] sm:$0xff]
  %v89 = vld [vmem:[%s0 + $0x210] sm:$0xff]
  %v90 = vld [vmem:[%s0 + $0x218] sm:$0xff]
  %v91 = vld [vmem:[%s0 + $0x220] sm:$0xff]
  %v92 = vld [vmem:[%s0 + $0x228] sm:$0xff]
  %v93 = vld [vmem:[%s0 + $0x230] sm:$0xff]
  %v94 = vld [vmem:[%s0 + $0x238] sm:$0xff]
  %v95 = vld [vmem:[%s0 + $0x240] sm:$0xff]
  %v96 = vld [vmem:[%s0 + $0x248] sm:$0xff]
  %v97 = vld [vmem:[%s0 + $0x250] sm:$0xff]
  %v98 = vld [vmem:[%s0 + $0x258] sm:$0xff]
  %v99 = vld [vmem:[%s0 + $0x260] sm:$0xff]
  %v100 = vld [vmem:[%s0 + $0x268] sm:$0xff]
  %v101 = vld [vmem:[%s0 + $0x270] sm:$0xff]
  %v102 = vld [vmem:[%s0 + $0x278] sm:$0xff]
  %v103 = vld [vmem:[%s0 + $0x280] sm:$0xff]
  %v104 = vld [vmem:[%s0 + $0x288] sm:$0xff]
  %v105 = vld [vmem:[%s0 + $0x290] sm:$0xff]
  %v106 = vld [vmem:[%s0 + $0x298] sm:$0xff]
  %v107 = vld [vmem:[%s0 + $0x2a0] sm:$0xff]
  %v108 = vld [vmem:[%s0 + $0x2a8] sm:$0xff]
  %v109 = vld [vmem:[%s0 + $0x2b0] sm:$0xff]
  %v110 = vld [vmem:[%s0 + $0x2b8] sm:$0xff]
  %v111 = vld [vmem:[%s0 + $0x2c0] sm:$0xff]
  %v112 = vld [vmem:[%s0 + $0x2c8] sm:$0xff]
  %v113 = vld [vmem:[%s0 + $0x2d0] sm:$0xff]
  %v114 = vld [vmem:[%s0 + $0x2d8] sm:$0xff]
  %v115 = vld [vmem:[%s0 + $0x2e0] sm:$0xff]
  %v116 = vld [vmem:[%s0 + $0x2e8] sm:$0xff]
  %v117 = vld [vmem:[%s0 + $0x2f0] sm:$0xff]
  %v118 = vld [vmem:[%s0 + $0x2f8] sm:$0xff]
  %v119 = vld [vmem:[%s0 + $0x300] sm:$0xff]
  %v120 = vld [vmem:[%s0 + $0x308] sm:$0xff]
  %v121 = vld [vmem:[%s0 + $0x310] sm:$0xff]
  %v122 = vld [vmem:[%s0 + $0x318] sm:$0xff]
  %v123 = vld [vmem:[%s0 + $0x320] sm:$0xff]
  %v124 = vld [vmem:[%s0 + $0x328] sm:$0xff]
  %v125 = vld [vmem:[%s0 + $0x330] sm:$0xff]
  %v126 = vld [vmem:[%s0 + $0x338] sm:$0xff]
  %v127 = vld [vmem:[%s0 + $0x340] sm:$0xff]
  %v128 = vld [vmem:[%s0 + $0x348] sm:$0xff]
  %v129 = vld [vmem:[%s0 + $0x350] sm:$0xff]
  %v130 = vld [vmem:[%s0 + $0x358] sm:$0xff]
  %v131 = vld [vmem:[%s0 + $0x360] sm:$0xff]
  %v132 = vld [vmem:[%s0 + $0x368] sm:$0xff]
  %v133 = vld [vmem:[%s0 + $0x370] sm:$0xff]
  %v134 = vld [vmem:[%s0 + $0x378] sm:$0xff]
  %v135 = vld [vmem:[%s0 + $0x380] sm:$0xff]
  %v136 = vld [vmem:[%s0 + $0x388] sm:$0xff]
  %v137 = vld [vmem:[%s0 + $0x390] sm:$0xff]
  %v138 = vld [vmem:[%s0 + $0x398] sm:$0xff]
  %v139 = vld [vmem:[%s0 + $0x3a0] sm:$0xff]
  %v140 = vld [vmem:[%s0 + $0x3a8] sm:$0xff]
  %v141 = vld [vmem:[%s0 + $0x3b0] sm:$0xff]
  %v142 = vld [vmem:[%s0 + $0x3b8] sm:$0xff]
  %v143 = vld [vmem:[%s0 + $0x3c0] sm:$0xff]
  %v144 = vld [vmem:[%s0 + $0x3c8] sm:$0xff]
  %v145 = vld [vmem:[%s0 + $0x3d0] sm:$0xff]
  %v146 = vld [vmem:[%s0 + $0x3d8] sm:$0xff]
  %v147 = vld [vmem:[%s0 + $0x3e0] sm:$0xff]
  %v148 = vld [vmem:[%s0 + $0x3e8] sm:$0xff]
  %v149 = vld [vmem:[%s0 + $0x3f0] sm:$0xff]
  %v150 = vld [vmem:[%s0 + $0x3f8] sm:$0xff]
  %v151 = vld [vmem:[%s1] sm:$0xff]
  %v152 = vld [vmem:[%s1 + $0x8] sm:$0xff]
  %v153 = vld [vmem:[%s1 + $0x10] sm:$0xff]
  %v154 = vld [vmem:[%s1 + $0x18] sm:$0xff]
  %v155 = vld [vmem:[%s1 + $0x20] sm:$0xff]
  %v156 = vld [vmem:[%s1 + $0x28] sm:$0xff]
  %v157 = vld [vmem:[%s1 + $0x30] sm:$0xff]
  %v158 = vld [vmem:[%s1 + $0x38] sm:$0xff]
  %v159 = vld [vmem:[%s1 + $0x40] sm:$0xff]
  %v160 = vld [vmem:[%s1 + $0x48] sm:$0xff]
  %v161 = vld [vmem:[%s1 + $0x50] sm:$0xff]
  %v162 = vld [vmem:[%s1 + $0x58] sm:$0xff]
  %v163 = vld [vmem:[%s1 + $0x60] sm:$0xff]
  %v164 = vld [vmem:[%s1 + $0x68] sm:$0xff]
  %v165 = vld [vmem:[%s1 + $0x70] sm:$0xff]
  %v166 = vld [vmem:[%s1 + $0x78] sm:$0xff]
  %v167 = vld [vmem:[%s1 + $0x80] sm:$0xff]
  %v168 = vld [vmem:[%s1 + $0x88] sm:$0xff]
  %v169 = vld [vmem:[%s1 + $0x90] sm:$0xff]
  %v170 = vld [vmem:[%s1 + $0x98] sm:$0xff]
  %v171 = vld [vmem:[%s1 + $0xa0] sm:$0xff]
  %v172 = vld [vmem:[%s1 + $0xa8] sm:$0xff]
  %v173 = vld [vmem:[%s1 + $0xb0] sm:$0xff]
  %v174 = vld [vmem:[%s1 + $0xb8] sm:$0xff]
  %v175 = vld [vmem:[%s1 + $0xc0] sm:$0xff]
  %v176 = vld [vmem:[%s1 + $0xc8] sm:$0xff]
  %v177 = vld [vmem:[%s1 + $0xd0] sm:$0xff]
  %v178 = vld [vmem:[%s1 + $0xd8] sm:$0xff]
  %v179 = vld [vmem:[%s1 + $0xe0] sm:$0xff]
  %v180 = vld [vmem:[%s1 + $0xe8] sm:$0xff]
  %v181 = vld [vmem:[%s1 + $0xf0] sm:$0xff]
  %v182 = vld [vmem:[%s1 + $0xf8] sm:$0xff]
  %v183 = vld [vmem:[%s1 + $0x100] sm:$0xff]
  %v184 = vld [vmem:[%s1 + $0x108] sm:$0xff]
  %v185 = vld [vmem:[%s1 + $0x110] sm:$0xff]
  %v186 = vld [vmem:[%s1 + $0x118] sm:$0xff]
  %v187 = vld [vmem:[%s1 + $0x120] sm:$0xff]
  %v188 = vld [vmem:[%s1 + $0x128] sm:$0xff]
  %v189 = vld [vmem:[%s1 + $0x130] sm:$0xff]
  %v190 = vld [vmem:[%s1 + $0x138] sm:$0xff]
  %v191 = vld [vmem:[%s1 + $0x140] sm:$0xff]
  %v192 = vld [vmem:[%s1 + $0x148] sm:$0xff]
  %v193 = vld [vmem:[%s1 + $0x150] sm:$0xff]
  %v194 = vld [vmem:[%s1 + $0x158] sm:$0xff]
  %v195 = vld [vmem:[%s1 + $0x160] sm:$0xff]
  %v196 = vld [vmem:[%s1 + $0x168] sm:$0xff]
  %v197 = vld [vmem:[%s1 + $0x170] sm:$0xff]
  %v198 = vld [vmem:[%s1 + $0x178] sm:$0xff]
  %v199 = vld [vmem:[%s1 + $0x180] sm:$0xff]
  %v200 = vld [vmem:[%s1 + $0x188] sm:$0xff]
  %v201 = vld [vmem:[%s1 + $0x190] sm:$0xff]
  %v202 = vld [vmem:[%s1 + $0x198] sm:$0xff]
  %v203 = vld [vmem:[%s1 + $0x1a0] sm:$0xff]
  %v204 = vld [vmem:[%s1 + $0x1a8] sm:$0xff]
  %v205 = vld [vmem:[%s1 + $0x1b0] sm:$0xff]
  %v206 = vld [vmem:[%s1 + $0x1b8] sm:$0xff]
  %v207 = vld [vmem:[%s1 + $0x1c0] sm:$0xff]
  %v208 = vld [vmem:[%s1 + $0x1c8] sm:$0xff]
  %v209 = vld [vmem:[%s1 + $0x1d0] sm:$0xff]
  %v210 = vld [vmem:[%s1 + $0x1d8] sm:$0xff]
  %v211 = vld [vmem:[%s1 + $0x1e0] sm:$0xff]
  %v212 = vld [vmem:[%s1 + $0x1e8] sm:$0xff]
  %v213 = vld [vmem:[%s1 + $0x1f0] sm:$0xff]
  %v214 = vld [vmem:[%s1 + $0x1f8] sm:$0xff]
  %v215 = vld [vmem:[%s1 + $0x200] sm:$0xff]
  %v216 = vld [vmem:[%s1 + $0x208] sm:$0xff]
  %v217 = vld [vmem:[%s1 + $0x210] sm:$0xff]
  %v218 = vld [vmem:[%s1 + $0x218] sm:$0xff]
  %v219 = vld [vmem:[%s1 + $0x220] sm:$0xff]
  %v220 = vld [vmem:[%s1 + $0x228] sm:$0xff]
  %v221 = vld [vmem:[%s1 + $0x230] sm:$0xff]
  %v222 = vld [vmem:[%s1 + $0x238] sm:$0xff]
  %v223 = vld [vmem:[%s1 + $0x240] sm:$0xff]
  %v224 = vld [vmem:[%s1 + $0x248] sm:$0xff]
  %v225 = vld [vmem:[%s1 + $0x250] sm:$0xff]
  %v226 = vld [vmem:[%s1 + $0x258] sm:$0xff]
  %v227 = vld [vmem:[%s1 + $0x260] sm:$0xff]
  %v228 = vld [vmem:[%s1 + $0x268] sm:$0xff]
  %v229 = vld [vmem:[%s1 + $0x270] sm:$0xff]
  %v230 = vld [vmem:[%s1 + $0x278] sm:$0xff]
  %v231 = vld [vmem:[%s1 + $0x280] sm:$0xff]
  %v232 = vld [vmem:[%s1 + $0x288] sm:$0xff]
  %v233 = vld [vmem:[%s1 + $0x290] sm:$0xff]
  %v234 = vld [vmem:[%s1 + $0x298] sm:$0xff]
  %v235 = vld [vmem:[%s1 + $0x2a0] sm:$0xff]
  %v236 = vld [vmem:[%s1 + $0x2a8] sm:$0xff]
  %v237 = vld [vmem:[%s1 + $0x2b0] sm:$0xff]
  %v238 = vld [vmem:[%s1 + $0x2b8] sm:$0xff]
  %v239 = vld [vmem:[%s1 + $0x2c0] sm:$0xff]
  %v240 = vld [vmem:[%s1 + $0x2c8] sm:$0xff]
  %v241 = vld [vmem:[%s1 + $0x2d0] sm:$0xff]
  %v242 = vld [vmem:[%s1 + $0x2d8] sm:$0xff]
  %v243 = vld [vmem:[%s1 + $0x2e0] sm:$0xff]
  %v244 = vld [vmem:[%s1 + $0x2e8] sm:$0xff]
  %v245 = vld [vmem:[%s1 + $0x2f0] sm:$0xff]
  %v246 = vld [vmem:[%s1 + $0x2f8] sm:$0xff]
  %v247 = vld [vmem:[%s1 + $0x300] sm:$0xff]
  %v248 = vld [vmem:[%s1 + $0x308] sm:$0xff]
  %v249 = vld [vmem:[%s1 + $0x310] sm:$0xff]
  %v250 = vld [vmem:[%s1 + $0x318] sm:$0xff]
  %v251 = vld [vmem:[%s1 + $0x320] sm:$0xff]
  %v252 = vld [vmem:[%s1 + $0x328] sm:$0xff]
  %v253 = vld [vmem:[%s1 + $0x330] sm:$0xff]
  %v254 = vld [vmem:[%s1 + $0x338] sm:$0xff]
  %v255 = vld [vmem:[%s1 + $0x340] sm:$0xff]
  %v256 = vld [vmem:[%s1 + $0x348] sm:$0xff]
  %v257 = vld [vmem:[%s1 + $0x350] sm:$0xff]
  %v258 = vld [vmem:[%s1 + $0x358] sm:$0xff]
  %v259 = vld [vmem:[%s1 + $0x360] sm:$0xff]
  %v260 = vld [vmem:[%s1 + $0x368] sm:$0xff]
  %v261 = vld [vmem:[%s1 + $0x370] sm:$0xff]
  %v262 = vld [vmem:[%s1 + $0x378] sm:$0xff]
  %v263 = vld [vmem:[%s1 + $0x380] sm:$0xff]
  %v264 = vld [vmem:[%s1 + $0x388] sm:$0xff]
  %v265 = vld [vmem:[%s1 + $0x390] sm:$0xff]
  %v266 = vld [vmem:[%s1 + $0x398] sm:$0xff]
  %v267 = vld [vmem:[%s1 + $0x3a0] sm:$0xff]
  %v268 = vld [vmem:[%s1 + $0x3a8] sm:$0xff]
  %v269 = vld [vmem:[%s1 + $0x3b0] sm:$0xff]
  %v270 = vld [vmem:[%s1 + $0x3b8] sm:$0xff]
  %v271 = vld [vmem:[%s1 + $0x3c0] sm:$0xff]
  %v272 = vld [vmem:[%s1 + $0x3c8] sm:$0xff]
  %v273 = vld [vmem:[%s1 + $0x3d0] sm:$0xff]
  %v274 = vld [vmem:[%s1 + $0x3d8] sm:$0xff]
  %v275 = vld [vmem:[%s1 + $0x3e0] sm:$0xff]
  %v276 = vld [vmem:[%s1 + $0x3e8] sm:$0xff]
  %v277 = vld [vmem:[%s1 + $0x3f0] sm:$0xff]
  %v278 = vld [vmem:[%s1 + $0x3f8] sm:$0xff]
  %280 = vset.pattern.permute.xlu0 0
  %281 = vperm.xlu0 %280, %v151
  %v282 = vpop.permute.xlu0 %281
  %285 = vset.pattern.permute.xlu0 0
  %286 = vperm.xlu0 %285, %v152
  %v287 = vpop.permute.xlu0 %286
  %290 = vset.pattern.permute.xlu0 0
  %291 = vperm.xlu0 %290, %v153
  %v292 = vpop.permute.xlu0 %291
  %295 = vset.pattern.permute.xlu0 0
  %296 = vperm.xlu0 %295, %v154
  %v297 = vpop.permute.xlu0 %296
  %300 = vset.pattern.permute.xlu0 0
  %301 = vperm.xlu0 %300, %v155
  %v302 = vpop.permute.xlu0 %301
  %305 = vset.pattern.permute.xlu0 0
  %306 = vperm.xlu0 %305, %v156
  %v307 = vpop.permute.xlu0 %306
  %310 = vset.pattern.permute.xlu0 0
  %311 = vperm.xlu0 %310, %v157
  %v312 = vpop.permute.xlu0 %311
  %315 = vset.pattern.permute.xlu0 0
  %316 = vperm.xlu0 %315, %v158
  %v317 = vpop.permute.xlu0 %316
  %320 = vset.pattern.permute.xlu0 0
  %321 = vperm.xlu0 %320, %v159
  %v322 = vpop.permute.xlu0 %321
  %325 = vset.pattern.permute.xlu0 0
  %326 = vperm.xlu0 %325, %v160
  %v327 = vpop.permute.xlu0 %326
  %330 = vset.pattern.permute.xlu0 0
  %331 = vperm.xlu0 %330, %v161
  %v332 = vpop.permute.xlu0 %331
  %335 = vset.pattern.permute.xlu0 0
  %336 = vperm.xlu0 %335, %v162
  %v337 = vpop.permute.xlu0 %336
  %340 = vset.pattern.permute.xlu0 0
  %341 = vperm.xlu0 %340, %v163
  %v342 = vpop.permute.xlu0 %341
  %345 = vset.pattern.permute.xlu0 0
  %346 = vperm.xlu0 %345, %v164
  %v347 = vpop.permute.xlu0 %346
  %350 = vset.pattern.permute.xlu0 0
  %351 = vperm.xlu0 %350, %v165
  %v352 = vpop.permute.xlu0 %351
  %355 = vset.pattern.permute.xlu0 0
  %356 = vperm.xlu0 %355, %v166
  %v357 = vpop.permute.xlu0 %356
  %360 = vset.pattern.permute.xlu0 0
  %361 = vperm.xlu0 %360, %v167
  %v362 = vpop.permute.xlu0 %361
  %365 = vset.pattern.permute.xlu0 0
  %366 = vperm.xlu0 %365, %v168
  %v367 = vpop.permute.xlu0 %366
  %370 = vset.pattern.permute.xlu0 0
  %371 = vperm.xlu0 %370, %v169
  %v372 = vpop.permute.xlu0 %371
  %375 = vset.pattern.permute.xlu0 0
  %376 = vperm.xlu0 %375, %v170
  %v377 = vpop.permute.xlu0 %376
  %380 = vset.pattern.permute.xlu0 0
  %381 = vperm.xlu0 %380, %v171
  %v382 = vpop.permute.xlu0 %381
  %385 = vset.pattern.permute.xlu0 0
  %386 = vperm.xlu0 %385, %v172
  %v387 = vpop.permute.xlu0 %386
  %390 = vset.pattern.permute.xlu0 0
  %391 = vperm.xlu0 %390, %v173
  %v392 = vpop.permute.xlu0 %391
  %395 = vset.pattern.permute.xlu0 0
  %396 = vperm.xlu0 %395, %v174
  %v397 = vpop.permute.xlu0 %396
  %400 = vset.pattern.permute.xlu0 0
  %401 = vperm.xlu0 %400, %v175
  %v402 = vpop.permute.xlu0 %401
  %405 = vset.pattern.permute.xlu0 0
  %406 = vperm.xlu0 %405, %v176
  %v407 = vpop.permute.xlu0 %406
  %410 = vset.pattern.permute.xlu0 0
  %411 = vperm.xlu0 %410, %v177
  %v412 = vpop.permute.xlu0 %411
  %415 = vset.pattern.permute.xlu0 0
  %416 = vperm.xlu0 %415, %v178
  %v417 = vpop.permute.xlu0 %416
  %420 = vset.pattern.permute.xlu0 0
  %421 = vperm.xlu0 %420, %v179
  %v422 = vpop.permute.xlu0 %421
  %425 = vset.pattern.permute.xlu0 0
  %426 = vperm.xlu0 %425, %v180
  %v427 = vpop.permute.xlu0 %426
  %430 = vset.pattern.permute.xlu0 0
  %431 = vperm.xlu0 %430, %v181
  %v432 = vpop.permute.xlu0 %431
  %435 = vset.pattern.permute.xlu0 0
  %436 = vperm.xlu0 %435, %v182
  %v437 = vpop.permute.xlu0 %436
  %440 = vset.pattern.permute.xlu0 0
  %441 = vperm.xlu0 %440, %v183
  %v442 = vpop.permute.xlu0 %441
  %445 = vset.pattern.permute.xlu0 0
  %446 = vperm.xlu0 %445, %v184
  %v447 = vpop.permute.xlu0 %446
  %450 = vset.pattern.permute.xlu0 0
  %451 = vperm.xlu0 %450, %v185
  %v452 = vpop.permute.xlu0 %451
  %455 = vset.pattern.permute.xlu0 0
  %456 = vperm.xlu0 %455, %v186
  %v457 = vpop.permute.xlu0 %456
  %460 = vset.pattern.permute.xlu0 0
  %461 = vperm.xlu0 %460, %v187
  %v462 = vpop.permute.xlu0 %461
  %465 = vset.pattern.permute.xlu0 0
  %466 = vperm.xlu0 %465, %v188
  %v467 = vpop.permute.xlu0 %466
  %470 = vset.pattern.permute.xlu0 0
  %471 = vperm.xlu0 %470, %v189
  %v472 = vpop.permute.xlu0 %471
  %475 = vset.pattern.permute.xlu0 0
  %476 = vperm.xlu0 %475, %v190
  %v477 = vpop.permute.xlu0 %476
  %480 = vset.pattern.permute.xlu0 0
  %481 = vperm.xlu0 %480, %v191
  %v482 = vpop.permute.xlu0 %481
  %485 = vset.pattern.permute.xlu0 0
  %486 = vperm.xlu0 %485, %v192
  %v487 = vpop.permute.xlu0 %486
  %490 = vset.pattern.permute.xlu0 0
  %491 = vperm.xlu0 %490, %v193
  %v492 = vpop.permute.xlu0 %491
  %495 = vset.pattern.permute.xlu0 0
  %496 = vperm.xlu0 %495, %v194
  %v497 = vpop.permute.xlu0 %496
  %500 = vset.pattern.permute.xlu0 0
  %501 = vperm.xlu0 %500, %v195
  %v502 = vpop.permute.xlu0 %501
  %505 = vset.pattern.permute.xlu0 0
  %506 = vperm.xlu0 %505, %v196
  %v507 = vpop.permute.xlu0 %506
  %510 = vset.pattern.permute.xlu0 0
  %511 = vperm.xlu0 %510, %v197
  %v512 = vpop.permute.xlu0 %511
  %515 = vset.pattern.permute.xlu0 0
  %516 = vperm.xlu0 %515, %v198
  %v517 = vpop.permute.xlu0 %516
  %520 = vset.pattern.permute.xlu0 0
  %521 = vperm.xlu0 %520, %v199
  %v522 = vpop.permute.xlu0 %521
  %525 = vset.pattern.permute.xlu0 0
  %526 = vperm.xlu0 %525, %v200
  %v527 = vpop.permute.xlu0 %526
  %530 = vset.pattern.permute.xlu0 0
  %531 = vperm.xlu0 %530, %v201
  %v532 = vpop.permute.xlu0 %531
  %535 = vset.pattern.permute.xlu0 0
  %536 = vperm.xlu0 %535, %v202
  %v537 = vpop.permute.xlu0 %536
  %540 = vset.pattern.permute.xlu0 0
  %541 = vperm.xlu0 %540, %v203
  %v542 = vpop.permute.xlu0 %541
  %545 = vset.pattern.permute.xlu0 0
  %546 = vperm.xlu0 %545, %v204
  %v547 = vpop.permute.xlu0 %546
  %550 = vset.pattern.permute.xlu0 0
  %551 = vperm.xlu0 %550, %v205
  %v552 = vpop.permute.xlu0 %551
  %555 = vset.pattern.permute.xlu0 0
  %556 = vperm.xlu0 %555, %v206
  %v557 = vpop.permute.xlu0 %556
  %560 = vset.pattern.permute.xlu0 0
  %561 = vperm.xlu0 %560, %v207
  %v562 = vpop.permute.xlu0 %561
  %565 = vset.pattern.permute.xlu0 0
  %566 = vperm.xlu0 %565, %v208
  %v567 = vpop.permute.xlu0 %566
  %570 = vset.pattern.permute.xlu0 0
  %571 = vperm.xlu0 %570, %v209
  %v572 = vpop.permute.xlu0 %571
  %575 = vset.pattern.permute.xlu0 0
  %576 = vperm.xlu0 %575, %v210
  %v577 = vpop.permute.xlu0 %576
  %580 = vset.pattern.permute.xlu0 0
  %581 = vperm.xlu0 %580, %v211
  %v582 = vpop.permute.xlu0 %581
  %585 = vset.pattern.permute.xlu0 0
  %586 = vperm.xlu0 %585, %v212
  %v587 = vpop.permute.xlu0 %586
  %590 = vset.pattern.permute.xlu0 0
  %591 = vperm.xlu0 %590, %v213
  %v592 = vpop.permute.xlu0 %591
  %595 = vset.pattern.permute.xlu0 0
  %596 = vperm.xlu0 %595, %v214
  %v597 = vpop.permute.xlu0 %596
  %600 = vset.pattern.permute.xlu0 0
  %601 = vperm.xlu0 %600, %v215
  %v602 = vpop.permute.xlu0 %601
  %605 = vset.pattern.permute.xlu0 0
  %606 = vperm.xlu0 %605, %v216
  %v607 = vpop.permute.xlu0 %606
  %610 = vset.pattern.permute.xlu0 0
  %611 = vperm.xlu0 %610, %v217
  %v612 = vpop.permute.xlu0 %611
  %615 = vset.pattern.permute.xlu0 0
  %616 = vperm.xlu0 %615, %v218
  %v617 = vpop.permute.xlu0 %616
  %620 = vset.pattern.permute.xlu0 0
  %621 = vperm.xlu0 %620, %v219
  %v622 = vpop.permute.xlu0 %621
  %625 = vset.pattern.permute.xlu0 0
  %626 = vperm.xlu0 %625, %v220
  %v627 = vpop.permute.xlu0 %626
  %630 = vset.pattern.permute.xlu0 0
  %631 = vperm.xlu0 %630, %v221
  %v632 = vpop.permute.xlu0 %631
  %635 = vset.pattern.permute.xlu0 0
  %636 = vperm.xlu0 %635, %v222
  %v637 = vpop.permute.xlu0 %636
  %640 = vset.pattern.permute.xlu0 0
  %641 = vperm.xlu0 %640, %v223
  %v642 = vpop.permute.xlu0 %641
  %645 = vset.pattern.permute.xlu0 0
  %646 = vperm.xlu0 %645, %v224
  %v647 = vpop.permute.xlu0 %646
  %650 = vset.pattern.permute.xlu0 0
  %651 = vperm.xlu0 %650, %v225
  %v652 = vpop.permute.xlu0 %651
  %655 = vset.pattern.permute.xlu0 0
  %656 = vperm.xlu0 %655, %v226
  %v657 = vpop.permute.xlu0 %656
  %660 = vset.pattern.permute.xlu0 0
  %661 = vperm.xlu0 %660, %v227
  %v662 = vpop.permute.xlu0 %661
  %665 = vset.pattern.permute.xlu0 0
  %666 = vperm.xlu0 %665, %v228
  %v667 = vpop.permute.xlu0 %666
  %670 = vset.pattern.permute.xlu0 0
  %671 = vperm.xlu0 %670, %v229
  %v672 = vpop.permute.xlu0 %671
  %675 = vset.pattern.permute.xlu0 0
  %676 = vperm.xlu0 %675, %v230
  %v677 = vpop.permute.xlu0 %676
  %680 = vset.pattern.permute.xlu0 0
  %681 = vperm.xlu0 %680, %v231
  %v682 = vpop.permute.xlu0 %681
  %685 = vset.pattern.permute.xlu0 0
  %686 = vperm.xlu0 %685, %v232
  %v687 = vpop.permute.xlu0 %686
  %690 = vset.pattern.permute.xlu0 0
  %691 = vperm.xlu0 %690, %v233
  %v692 = vpop.permute.xlu0 %691
  %695 = vset.pattern.permute.xlu0 0
  %696 = vperm.xlu0 %695, %v234
  %v697 = vpop.permute.xlu0 %696
  %700 = vset.pattern.permute.xlu0 0
  %701 = vperm.xlu0 %700, %v235
  %v702 = vpop.permute.xlu0 %701
  %705 = vset.pattern.permute.xlu0 0
  %706 = vperm.xlu0 %705, %v236
  %v707 = vpop.permute.xlu0 %706
  %710 = vset.pattern.permute.xlu0 0
  %711 = vperm.xlu0 %710, %v237
  %v712 = vpop.permute.xlu0 %711
  %715 = vset.pattern.permute.xlu0 0
  %716 = vperm.xlu0 %715, %v238
  %v717 = vpop.permute.xlu0 %716
  %720 = vset.pattern.permute.xlu0 0
  %721 = vperm.xlu0 %720, %v239
  %v722 = vpop.permute.xlu0 %721
  %725 = vset.pattern.permute.xlu0 0
  %726 = vperm.xlu0 %725, %v240
  %v727 = vpop.permute.xlu0 %726
  %730 = vset.pattern.permute.xlu0 0
  %731 = vperm.xlu0 %730, %v241
  %v732 = vpop.permute.xlu0 %731
  %735 = vset.pattern.permute.xlu0 0
  %736 = vperm.xlu0 %735, %v242
  %v737 = vpop.permute.xlu0 %736
  %740 = vset.pattern.permute.xlu0 0
  %741 = vperm.xlu0 %740, %v243
  %v742 = vpop.permute.xlu0 %741
  %745 = vset.pattern.permute.xlu0 0
  %746 = vperm.xlu0 %745, %v244
  %v747 = vpop.permute.xlu0 %746
  %750 = vset.pattern.permute.xlu0 0
  %751 = vperm.xlu0 %750, %v245
  %v752 = vpop.permute.xlu0 %751
  %755 = vset.pattern.permute.xlu0 0
  %756 = vperm.xlu0 %755, %v246
  %v757 = vpop.permute.xlu0 %756
  %760 = vset.pattern.permute.xlu0 0
  %761 = vperm.xlu0 %760, %v247
  %v762 = vpop.permute.xlu0 %761
  %765 = vset.pattern.permute.xlu0 0
  %766 = vperm.xlu0 %765, %v248
  %v767 = vpop.permute.xlu0 %766
  %770 = vset.pattern.permute.xlu0 0
  %771 = vperm.xlu0 %770, %v249
  %v772 = vpop.permute.xlu0 %771
  %775 = vset.pattern.permute.xlu0 0
  %776 = vperm.xlu0 %775, %v250
  %v777 = vpop.permute.xlu0 %776
  %780 = vset.pattern.permute.xlu0 0
  %781 = vperm.xlu0 %780, %v251
  %v782 = vpop.permute.xlu0 %781
  %785 = vset.pattern.permute.xlu0 0
  %786 = vperm.xlu0 %785, %v252
  %v787 = vpop.permute.xlu0 %786
  %790 = vset.pattern.permute.xlu0 0
  %791 = vperm.xlu0 %790, %v253
  %v792 = vpop.permute.xlu0 %791
  %795 = vset.pattern.permute.xlu0 0
  %796 = vperm.xlu0 %795, %v254
  %v797 = vpop.permute.xlu0 %796
  %800 = vset.pattern.permute.xlu0 0
  %801 = vperm.xlu0 %800, %v255
  %v802 = vpop.permute.xlu0 %801
  %805 = vset.pattern.permute.xlu0 0
  %806 = vperm.xlu0 %805, %v256
  %v807 = vpop.permute.xlu0 %806
  %810 = vset.pattern.permute.xlu0 0
  %811 = vperm.xlu0 %810, %v257
  %v812 = vpop.permute.xlu0 %811
  %815 = vset.pattern.permute.xlu0 0
  %816 = vperm.xlu0 %815, %v258
  %v817 = vpop.permute.xlu0 %816
  %820 = vset.pattern.permute.xlu0 0
  %821 = vperm.xlu0 %820, %v259
  %v822 = vpop.permute.xlu0 %821
  %825 = vset.pattern.permute.xlu0 0
  %826 = vperm.xlu0 %825, %v260
  %v827 = vpop.permute.xlu0 %826
  %830 = vset.pattern.permute.xlu0 0
  %831 = vperm.xlu0 %830, %v261
  %v832 = vpop.permute.xlu0 %831
  %835 = vset.pattern.permute.xlu0 0
  %836 = vperm.xlu0 %835, %v262
  %v837 = vpop.permute.xlu0 %836
  %840 = vset.pattern.permute.xlu0 0
  %841 = vperm.xlu0 %840, %v263
  %v842 = vpop.permute.xlu0 %841
  %845 = vset.pattern.permute.xlu0 0
  %846 = vperm.xlu0 %845, %v264
  %v847 = vpop.permute.xlu0 %846
  %850 = vset.pattern.permute.xlu0 0
  %851 = vperm.xlu0 %850, %v265
  %v852 = vpop.permute.xlu0 %851
  %855 = vset.pattern.permute.xlu0 0
  %856 = vperm.xlu0 %855, %v266
  %v857 = vpop.permute.xlu0 %856
  %860 = vset.pattern.permute.xlu0 0
  %861 = vperm.xlu0 %860, %v267
  %v862 = vpop.permute.xlu0 %861
  %865 = vset.pattern.permute.xlu0 0
  %866 = vperm.xlu0 %865, %v268
  %v867 = vpop.permute.xlu0 %866
  %870 = vset.pattern.permute.xlu0 0
  %871 = vperm.xlu0 %870, %v269
  %v872 = vpop.permute.xlu0 %871
  %875 = vset.pattern.permute.xlu0 0
  %876 = vperm.xlu0 %875, %v270
  %v877 = vpop.permute.xlu0 %876
  %880 = vset.pattern.permute.xlu0 0
  %881 = vperm.xlu0 %880, %v271
  %v882 = vpop.permute.xlu0 %881
  %885 = vset.pattern.permute.xlu0 0
  %886 = vperm.xlu0 %885, %v272
  %v887 = vpop.permute.xlu0 %886
  %890 = vset.pattern.permute.xlu0 0
  %891 = vperm.xlu0 %890, %v273
  %v892 = vpop.permute.xlu0 %891
  %895 = vset.pattern.permute.xlu0 0
  %896 = vperm.xlu0 %895, %v274
  %v897 = vpop.permute.xlu0 %896
  %900 = vset.pattern.permute.xlu0 0
  %901 = vperm.xlu0 %900, %v275
  %v902 = vpop.permute.xlu0 %901
  %905 = vset.pattern.permute.xlu0 0
  %906 = vperm.xlu0 %905, %v276
  %v907 = vpop.permute.xlu0 %906
  %910 = vset.pattern.permute.xlu0 0
  %911 = vperm.xlu0 %910, %v277
  %v912 = vpop.permute.xlu0 %911
  %915 = vset.pattern.permute.xlu0 0
  %916 = vperm.xlu0 %915, %v278
  %v917 = vpop.permute.xlu0 %916
  %v919 = vadd.f32 %v23, %v282
  %v920 = vadd.f32 %v24, %v287
  %v921 = vadd.f32 %v25, %v292
  %v922 = vadd.f32 %v26, %v297
  %v923 = vadd.f32 %v27, %v302
  %v924 = vadd.f32 %v28, %v307
  %v925 = vadd.f32 %v29, %v312
  %v926 = vadd.f32 %v30, %v317
  %v927 = vadd.f32 %v31, %v322
  %v928 = vadd.f32 %v32, %v327
  %v929 = vadd.f32 %v33, %v332
  %v930 = vadd.f32 %v34, %v337
  %v931 = vadd.f32 %v35, %v342
  %v932 = vadd.f32 %v36, %v347
  %v933 = vadd.f32 %v37, %v352
  %v934 = vadd.f32 %v38, %v357
  %v935 = vadd.f32 %v39, %v362
  %v936 = vadd.f32 %v40, %v367
  %v937 = vadd.f32 %v41, %v372
  %v938 = vadd.f32 %v42, %v377
  %v939 = vadd.f32 %v43, %v382
  %v940 = vadd.f32 %v44, %v387
  %v941 = vadd.f32 %v45, %v392
  %v942 = vadd.f32 %v46, %v397
  %v943 = vadd.f32 %v47, %v402
  %v944 = vadd.f32 %v48, %v407
  %v945 = vadd.f32 %v49, %v412
  %v946 = vadd.f32 %v50, %v417
  %v947 = vadd.f32 %v51, %v422
  %v948 = vadd.f32 %v52, %v427
  %v949 = vadd.f32 %v53, %v432
  %v950 = vadd.f32 %v54, %v437
  %v951 = vadd.f32 %v55, %v442
  %v952 = vadd.f32 %v56, %v447
  %v953 = vadd.f32 %v57, %v452
  %v954 = vadd.f32 %v58, %v457
  %v955 = vadd.f32 %v59, %v462
  %v956 = vadd.f32 %v60, %v467
  %v957 = vadd.f32 %v61, %v472
  %v958 = vadd.f32 %v62, %v477
  %v959 = vadd.f32 %v63, %v482
  %v960 = vadd.f32 %v64, %v487
  %v961 = vadd.f32 %v65, %v492
  %v962 = vadd.f32 %v66, %v497
  %v963 = vadd.f32 %v67, %v502
  %v964 = vadd.f32 %v68, %v507
  %v965 = vadd.f32 %v69, %v512
  %v966 = vadd.f32 %v70, %v517
  %v967 = vadd.f32 %v71, %v522
  %v968 = vadd.f32 %v72, %v527
  %v969 = vadd.f32 %v73, %v532
  %v970 = vadd.f32 %v74, %v537
  %v971 = vadd.f32 %v75, %v542
  %v972 = vadd.f32 %v76, %v547
  %v973 = vadd.f32 %v77, %v552
  %v974 = vadd.f32 %v78, %v557
  %v975 = vadd.f32 %v79, %v562
  %v976 = vadd.f32 %v80, %v567
  %v977 = vadd.f32 %v81, %v572
  %v978 = vadd.f32 %v82, %v577
  %v979 = vadd.f32 %v83, %v582
  %v980 = vadd.f32 %v84, %v587
  %v981 = vadd.f32 %v85, %v592
  %v982 = vadd.f32 %v86, %v597
  %v983 = vadd.f32 %v87, %v602
  %v984 = vadd.f32 %v88, %v607
  %v985 = vadd.f32 %v89, %v612
  %v986 = vadd.f32 %v90, %v617
  %v987 = vadd.f32 %v91, %v622
  %v988 = vadd.f32 %v92, %v627
  %v989 = vadd.f32 %v93, %v632
  %v990 = vadd.f32 %v94, %v637
  %v991 = vadd.f32 %v95, %v642
  %v992 = vadd.f32 %v96, %v647
  %v993 = vadd.f32 %v97, %v652
  %v994 = vadd.f32 %v98, %v657
  %v995 = vadd.f32 %v99, %v662
  %v996 = vadd.f32 %v100, %v667
  %v997 = vadd.f32 %v101, %v672
  %v998 = vadd.f32 %v102, %v677
  %v999 = vadd.f32 %v103, %v682
  %v1000 = vadd.f32 %v104, %v687
  %v1001 = vadd.f32 %v105, %v692
  %v1002 = vadd.f32 %v106, %v697
  %v1003 = vadd.f32 %v107, %v702
  %v1004 = vadd.f32 %v108, %v707
  %v1005 = vadd.f32 %v109, %v712
  %v1006 = vadd.f32 %v110, %v717
  %v1007 = vadd.f32 %v111, %v722
  %v1008 = vadd.f32 %v112, %v727
  %v1009 = vadd.f32 %v113, %v732
  %v1010 = vadd.f32 %v114, %v737
  %v1011 = vadd.f32 %v115, %v742
  %v1012 = vadd.f32 %v116, %v747
  %v1013 = vadd.f32 %v117, %v752
  %v1014 = vadd.f32 %v118, %v757
  %v1015 = vadd.f32 %v119, %v762
  %v1016 = vadd.f32 %v120, %v767
  %v1017 = vadd.f32 %v121, %v772
  %v1018 = vadd.f32 %v122, %v777
  %v1019 = vadd.f32 %v123, %v782
  %v1020 = vadd.f32 %v124, %v787
  %v1021 = vadd.f32 %v125, %v792
  %v1022 = vadd.f32 %v126, %v797
  %v1023 = vadd.f32 %v127, %v802
  %v1024 = vadd.f32 %v128, %v807
  %v1025 = vadd.f32 %v129, %v812
  %v1026 = vadd.f32 %v130, %v817
  %v1027 = vadd.f32 %v131, %v822
  %v1028 = vadd.f32 %v132, %v827
  %v1029 = vadd.f32 %v133, %v832
  %v1030 = vadd.f32 %v134, %v837
  %v1031 = vadd.f32 %v135, %v842
  %v1032 = vadd.f32 %v136, %v847
  %v1033 = vadd.f32 %v137, %v852
  %v1034 = vadd.f32 %v138, %v857
  %v1035 = vadd.f32 %v139, %v862
  %v1036 = vadd.f32 %v140, %v867
  %v1037 = vadd.f32 %v141, %v872
  %v1038 = vadd.f32 %v142, %v877
  %v1039 = vadd.f32 %v143, %v882
  %v1040 = vadd.f32 %v144, %v887
  %v1041 = vadd.f32 %v145, %v892
  %v1042 = vadd.f32 %v146, %v897
  %v1043 = vadd.f32 %v147, %v902
  %v1044 = vadd.f32 %v148, %v907
  %v1045 = vadd.f32 %v149, %v912
  %v1046 = vadd.f32 %v150, %v917
  %v1047 = vmax.f32 %v919, 0.0
  %v1048 = vmax.f32 %v920, 0.0
  %v1049 = vmax.f32 %v921, 0.0
  %v1050 = vmax.f32 %v922, 0.0
  %v1051 = vmax.f32 %v923, 0.0
  %v1052 = vmax.f32 %v924, 0.0
  %v1053 = vmax.f32 %v925, 0.0
  %v1054 = vmax.f32 %v926, 0.0
  %v1055 = vmax.f32 %v927, 0.0
  %v1056 = vmax.f32 %v928, 0.0
  %v1057 = vmax.f32 %v929, 0.0
  %v1058 = vmax.f32 %v930, 0.0
  %v1059 = vmax.f32 %v931, 0.0
  %v1060 = vmax.f32 %v932, 0.0
  %v1061 = vmax.f32 %v933, 0.0
  %v1062 = vmax.f32 %v934, 0.0
  %v1063 = vmax.f32 %v935, 0.0
  %v1064 = vmax.f32 %v936, 0.0
  %v1065 = vmax.f32 %v937, 0.0
  %v1066 = vmax.f32 %v938, 0.0
  %v1067 = vmax.f32 %v939, 0.0
  %v1068 = vmax.f32 %v940, 0.0
  %v1069 = vmax.f32 %v941, 0.0
  %v1070 = vmax.f32 %v942, 0.0
  %v1071 = vmax.f32 %v943, 0.0
  %v1072 = vmax.f32 %v944, 0.0
  %v1073 = vmax.f32 %v945, 0.0
  %v1074 = vmax.f32 %v946, 0.0
  %v1075 = vmax.f32 %v947, 0.0
  %v1076 = vmax.f32 %v948, 0.0
  %v1077 = vmax.f32 %v949, 0.0
  %v1078 = vmax.f32 %v950, 0.0
  %v1079 = vmax.f32 %v951, 0.0
  %v1080 = vmax.f32 %v952, 0.0
  %v1081 = vmax.f32 %v953, 0.0
  %v1082 = vmax.f32 %v954, 0.0
  %v1083 = vmax.f32 %v955, 0.0
  %v1084 = vmax.f32 %v956, 0.0
  %v1085 = vmax.f32 %v957, 0.0
  %v1086 = vmax.f32 %v958, 0.0
  %v1087 = vmax.f32 %v959, 0.0
  %v1088 = vmax.f32 %v960, 0.0
  %v1089 = vmax.f32 %v961, 0.0
  %v1090 = vmax.f32 %v962, 0.0
  %v1091 = vmax.f32 %v963, 0.0
  %v1092 = vmax.f32 %v964, 0.0
  %v1093 = vmax.f32 %v965, 0.0
  %v1094 = vmax.f32 %v966, 0.0
  %v1095 = vmax.f32 %v967, 0.0
  %v1096 = vmax.f32 %v968, 0.0
  %v1097 = vmax.f32 %v969, 0.0
  %v1098 = vmax.f32 %v970, 0.0
  %v1099 = vmax.f32 %v971, 0.0
  %v1100 = vmax.f32 %v972, 0.0
  %v1101 = vmax.f32 %v973, 0.0
  %v1102 = vmax.f32 %v974, 0.0
  %v1103 = vmax.f32 %v975, 0.0
  %v1104 = vmax.f32 %v976, 0.0
  %v1105 = vmax.f32 %v977, 0.0
  %v1106 = vmax.f32 %v978, 0.0
  %v1107 = vmax.f32 %v979, 0.0
  %v1108 = vmax.f32 %v980, 0.0
  %v1109 = vmax.f32 %v981, 0.0
  %v1110 = vmax.f32 %v982, 0.0
  %v1111 = vmax.f32 %v983, 0.0
  %v1112 = vmax.f32 %v984, 0.0
  %v1113 = vmax.f32 %v985, 0.0
  %v1114 = vmax.f32 %v986, 0.0
  %v1115 = vmax.f32 %v987, 0.0
  %v1116 = vmax.f32 %v988, 0.0
  %v1117 = vmax.f32 %v989, 0.0
  %v1118 = vmax.f32 %v990, 0.0
  %v1119 = vmax.f32 %v991, 0.0
  %v1120 = vmax.f32 %v992, 0.0
  %v1121 = vmax.f32 %v993, 0.0
  %v1122 = vmax.f32 %v994, 0.0
  %v1123 = vmax.f32 %v995, 0.0
  %v1124 = vmax.f32 %v996, 0.0
  %v1125 = vmax.f32 %v997, 0.0
  %v1126 = vmax.f32 %v998, 0.0
  %v1127 = vmax.f32 %v999, 0.0
  %v1128 = vmax.f32 %v1000, 0.0
  %v1129 = vmax.f32 %v1001, 0.0
  %v1130 = vmax.f32 %v1002, 0.0
  %v1131 = vmax.f32 %v1003, 0.0
  %v1132 = vmax.f32 %v1004, 0.0
  %v1133 = vmax.f32 %v1005, 0.0
  %v1134 = vmax.f32 %v1006, 0.0
  %v1135 = vmax.f32 %v1007, 0.0
  %v1136 = vmax.f32 %v1008, 0.0
  %v1137 = vmax.f32 %v1009, 0.0
  %v1138 = vmax.f32 %v1010, 0.0
  %v1139 = vmax.f32 %v1011, 0.0
  %v1140 = vmax.f32 %v1012, 0.0
  %v1141 = vmax.f32 %v1013, 0.0
  %v1142 = vmax.f32 %v1014, 0.0
  %v1143 = vmax.f32 %v1015, 0.0
  %v1144 = vmax.f32 %v1016, 0.0
  %v1145 = vmax.f32 %v1017, 0.0
  %v1146 = vmax.f32 %v1018, 0.0
  %v1147 = vmax.f32 %v1019, 0.0
  %v1148 = vmax.f32 %v1020, 0.0
  %v1149 = vmax.f32 %v1021, 0.0
  %v1150 = vmax.f32 %v1022, 0.0
  %v1151 = vmax.f32 %v1023, 0.0
  %v1152 = vmax.f32 %v1024, 0.0
  %v1153 = vmax.f32 %v1025, 0.0
  %v1154 = vmax.f32 %v1026, 0.0
  %v1155 = vmax.f32 %v1027, 0.0
  %v1156 = vmax.f32 %v1028, 0.0
  %v1157 = vmax.f32 %v1029, 0.0
  %v1158 = vmax.f32 %v1030, 0.0
  %v1159 = vmax.f32 %v1031, 0.0
  %v1160 = vmax.f32 %v1032, 0.0
  %v1161 = vmax.f32 %v1033, 0.0
  %v1162 = vmax.f32 %v1034, 0.0
  %v1163 = vmax.f32 %v1035, 0.0
  %v1164 = vmax.f32 %v1036, 0.0
  %v1165 = vmax.f32 %v1037, 0.0
  %v1166 = vmax.f32 %v1038, 0.0
  %v1167 = vmax.f32 %v1039, 0.0
  %v1168 = vmax.f32 %v1040, 0.0
  %v1169 = vmax.f32 %v1041, 0.0
  %v1170 = vmax.f32 %v1042, 0.0
  %v1171 = vmax.f32 %v1043, 0.0
  %v1172 = vmax.f32 %v1044, 0.0
  %v1173 = vmax.f32 %v1045, 0.0
  %v1174 = vmax.f32 %v1046, 0.0
  %v1175 = vld [vmem:[%s2] sm:$0xff]
  %v1176 = vld [vmem:[%s2 + $0x8] sm:$0xff]
  %v1177 = vld [vmem:[%s2 + $0x10] sm:$0xff]
  %v1178 = vld [vmem:[%s2 + $0x18] sm:$0xff]
  %v1179 = vld [vmem:[%s2 + $0x20] sm:$0xff]
  %v1180 = vld [vmem:[%s2 + $0x28] sm:$0xff]
  %v1181 = vld [vmem:[%s2 + $0x30] sm:$0xff]
  %v1182 = vld [vmem:[%s2 + $0x38] sm:$0xff]
  %v1183 = vld [vmem:[%s2 + $0x40] sm:$0xff]
  %v1184 = vld [vmem:[%s2 + $0x48] sm:$0xff]
  %v1185 = vld [vmem:[%s2 + $0x50] sm:$0xff]
  %v1186 = vld [vmem:[%s2 + $0x58] sm:$0xff]
  %v1187 = vld [vmem:[%s2 + $0x60] sm:$0xff]
  %v1188 = vld [vmem:[%s2 + $0x68] sm:$0xff]
  %v1189 = vld [vmem:[%s2 + $0x70] sm:$0xff]
  %v1190 = vld [vmem:[%s2 + $0x78] sm:$0xff]
  %v1191 = vld [vmem:[%s2 + $0x80] sm:$0xff]
  %v1192 = vld [vmem:[%s2 + $0x88] sm:$0xff]
  %v1193 = vld [vmem:[%s2 + $0x90] sm:$0xff]
  %v1194 = vld [vmem:[%s2 + $0x98] sm:$0xff]
  %v1195 = vld [vmem:[%s2 + $0xa0] sm:$0xff]
  %v1196 = vld [vmem:[%s2 + $0xa8] sm:$0xff]
  %v1197 = vld [vmem:[%s2 + $0xb0] sm:$0xff]
  %v1198 = vld [vmem:[%s2 + $0xb8] sm:$0xff]
  %v1199 = vld [vmem:[%s2 + $0xc0] sm:$0xff]
  %v1200 = vld [vmem:[%s2 + $0xc8] sm:$0xff]
  %v1201 = vld [vmem:[%s2 + $0xd0] sm:$0xff]
  %v1202 = vld [vmem:[%s2 + $0xd8] sm:$0xff]
  %v1203 = vld [vmem:[%s2 + $0xe0] sm:$0xff]
  %v1204 = vld [vmem:[%s2 + $0xe8] sm:$0xff]
  %v1205 = vld [vmem:[%s2 + $0xf0] sm:$0xff]
  %v1206 = vld [vmem:[%s2 + $0xf8] sm:$0xff]
  %v1207 = vld [vmem:[%s2 + $0x100] sm:$0xff]
  %v1208 = vld [vmem:[%s2 + $0x108] sm:$0xff]
  %v1209 = vld [vmem:[%s2 + $0x110] sm:$0xff]
  %v1210 = vld [vmem:[%s2 + $0x118] sm:$0xff]
  %v1211 = vld [vmem:[%s2 + $0x120] sm:$0xff]
  %v1212 = vld [vmem:[%s2 + $0x128] sm:$0xff]
  %v1213 = vld [vmem:[%s2 + $0x130] sm:$0xff]
  %v1214 = vld [vmem:[%s2 + $0x138] sm:$0xff]
  %v1215 = vld [vmem:[%s2 + $0x140] sm:$0xff]
  %v1216 = vld [vmem:[%s2 + $0x148] sm:$0xff]
  %v1217 = vld [vmem:[%s2 + $0x150] sm:$0xff]
  %v1218 = vld [vmem:[%s2 + $0x158] sm:$0xff]
  %v1219 = vld [vmem:[%s2 + $0x160] sm:$0xff]
  %v1220 = vld [vmem:[%s2 + $0x168] sm:$0xff]
  %v1221 = vld [vmem:[%s2 + $0x170] sm:$0xff]
  %v1222 = vld [vmem:[%s2 + $0x178] sm:$0xff]
  %v1223 = vld [vmem:[%s2 + $0x180] sm:$0xff]
  %v1224 = vld [vmem:[%s2 + $0x188] sm:$0xff]
  %v1225 = vld [vmem:[%s2 + $0x190] sm:$0xff]
  %v1226 = vld [vmem:[%s2 + $0x198] sm:$0xff]
  %v1227 = vld [vmem:[%s2 + $0x1a0] sm:$0xff]
  %v1228 = vld [vmem:[%s2 + $0x1a8] sm:$0xff]
  %v1229 = vld [vmem:[%s2 + $0x1b0] sm:$0xff]
  %v1230 = vld [vmem:[%s2 + $0x1b8] sm:$0xff]
  %v1231 = vld [vmem:[%s2 + $0x1c0] sm:$0xff]
  %v1232 = vld [vmem:[%s2 + $0x1c8] sm:$0xff]
  %v1233 = vld [vmem:[%s2 + $0x1d0] sm:$0xff]
  %v1234 = vld [vmem:[%s2 + $0x1d8] sm:$0xff]
  %v1235 = vld [vmem:[%s2 + $0x1e0] sm:$0xff]
  %v1236 = vld [vmem:[%s2 + $0x1e8] sm:$0xff]
  %v1237 = vld [vmem:[%s2 + $0x1f0] sm:$0xff]
  %v1238 = vld [vmem:[%s2 + $0x1f8] sm:$0xff]
  %v1239 = vld [vmem:[%s2 + $0x200] sm:$0xff]
  %v1240 = vld [vmem:[%s2 + $0x208] sm:$0xff]
  %v1241 = vld [vmem:[%s2 + $0x210] sm:$0xff]
  %v1242 = vld [vmem:[%s2 + $0x218] sm:$0xff]
  %v1243 = vld [vmem:[%s2 + $0x220] sm:$0xff]
  %v1244 = vld [vmem:[%s2 + $0x228] sm:$0xff]
  %v1245 = vld [vmem:[%s2 + $0x230] sm:$0xff]
  %v1246 = vld [vmem:[%s2 + $0x238] sm:$0xff]
  %v1247 = vld [vmem:[%s2 + $0x240] sm:$0xff]
  %v1248 = vld [vmem:[%s2 + $0x248] sm:$0xff]
  %v1249 = vld [vmem:[%s2 + $0x250] sm:$0xff]
  %v1250 = vld [vmem:[%s2 + $0x258] sm:$0xff]
  %v1251 = vld [vmem:[%s2 + $0x260] sm:$0xff]
  %v1252 = vld [vmem:[%s2 + $0x268] sm:$0xff]
  %v1253 = vld [vmem:[%s2 + $0x270] sm:$0xff]
  %v1254 = vld [vmem:[%s2 + $0x278] sm:$0xff]
  %v1255 = vld [vmem:[%s2 + $0x280] sm:$0xff]
  %v1256 = vld [vmem:[%s2 + $0x288] sm:$0xff]
  %v1257 = vld [vmem:[%s2 + $0x290] sm:$0xff]
  %v1258 = vld [vmem:[%s2 + $0x298] sm:$0xff]
  %v1259 = vld [vmem:[%s2 + $0x2a0] sm:$0xff]
  %v1260 = vld [vmem:[%s2 + $0x2a8] sm:$0xff]
  %v1261 = vld [vmem:[%s2 + $0x2b0] sm:$0xff]
  %v1262 = vld [vmem:[%s2 + $0x2b8] sm:$0xff]
  %v1263 = vld [vmem:[%s2 + $0x2c0] sm:$0xff]
  %v1264 = vld [vmem:[%s2 + $0x2c8] sm:$0xff]
  %v1265 = vld [vmem:[%s2 + $0x2d0] sm:$0xff]
  %v1266 = vld [vmem:[%s2 + $0x2d8] sm:$0xff]
  %v1267 = vld [vmem:[%s2 + $0x2e0] sm:$0xff]
  %v1268 = vld [vmem:[%s2 + $0x2e8] sm:$0xff]
  %v1269 = vld [vmem:[%s2 + $0x2f0] sm:$0xff]
  %v1270 = vld [vmem:[%s2 + $0x2f8] sm:$0xff]
  %v1271 = vld [vmem:[%s2 + $0x300] sm:$0xff]
  %v1272 = vld [vmem:[%s2 + $0x308] sm:$0xff]
  %v1273 = vld [vmem:[%s2 + $0x310] sm:$0xff]
  %v1274 = vld [vmem:[%s2 + $0x318] sm:$0xff]
  %v1275 = vld [vmem:[%s2 + $0x320] sm:$0xff]
  %v1276 = vld [vmem:[%s2 + $0x328] sm:$0xff]
  %v1277 = vld [vmem:[%s2 + $0x330] sm:$0xff]
  %v1278 = vld [vmem:[%s2 + $0x338] sm:$0xff]
  %v1279 = vld [vmem:[%s2 + $0x340] sm:$0xff]
  %v1280 = vld [vmem:[%s2 + $0x348] sm:$0xff]
  %v1281 = vld [vmem:[%s2 + $0x350] sm:$0xff]
  %v1282 = vld [vmem:[%s2 + $0x358] sm:$0xff]
  %v1283 = vld [vmem:[%s2 + $0x360] sm:$0xff]
  %v1284 = vld [vmem:[%s2 + $0x368] sm:$0xff]
  %v1285 = vld [vmem:[%s2 + $0x370] sm:$0xff]
  %v1286 = vld [vmem:[%s2 + $0x378] sm:$0xff]
  %v1287 = vld [vmem:[%s2 + $0x380] sm:$0xff]
  %v1288 = vld [vmem:[%s2 + $0x388] sm:$0xff]
  %v1289 = vld [vmem:[%s2 + $0x390] sm:$0xff]
  %v1290 = vld [vmem:[%s2 + $0x398] sm:$0xff]
  %v1291 = vld [vmem:[%s2 + $0x3a0] sm:$0xff]
  %v1292 = vld [vmem:[%s2 + $0x3a8] sm:$0xff]
  %v1293 = vld [vmem:[%s2 + $0x3b0] sm:$0xff]
  %v1294 = vld [vmem:[%s2 + $0x3b8] sm:$0xff]
  %v1295 = vld [vmem:[%s2 + $0x3c0] sm:$0xff]
  %v1296 = vld [vmem:[%s2 + $0x3c8] sm:$0xff]
  %v1297 = vld [vmem:[%s2 + $0x3d0] sm:$0xff]
  %v1298 = vld [vmem:[%s2 + $0x3d8] sm:$0xff]
  %v1299 = vld [vmem:[%s2 + $0x3e0] sm:$0xff]
  %v1300 = vld [vmem:[%s2 + $0x3e8] sm:$0xff]
  %v1301 = vld [vmem:[%s2 + $0x3f0] sm:$0xff]
  %v1302 = vld [vmem:[%s2 + $0x3f8] sm:$0xff]
  %v1303 = vld [vmem:[%s2 + $0x400] sm:$0xff]
  %v1304 = vld [vmem:[%s2 + $0x408] sm:$0xff]
  %v1305 = vld [vmem:[%s2 + $0x410] sm:$0xff]
  %v1306 = vld [vmem:[%s2 + $0x418] sm:$0xff]
  %v1307 = vld [vmem:[%s2 + $0x420] sm:$0xff]
  %v1308 = vld [vmem:[%s2 + $0x428] sm:$0xff]
  %v1309 = vld [vmem:[%s2 + $0x430] sm:$0xff]
  %v1310 = vld [vmem:[%s2 + $0x438] sm:$0xff]
  %v1311 = vld [vmem:[%s2 + $0x440] sm:$0xff]
  %v1312 = vld [vmem:[%s2 + $0x448] sm:$0xff]
  %v1313 = vld [vmem:[%s2 + $0x450] sm:$0xff]
  %v1314 = vld [vmem:[%s2 + $0x458] sm:$0xff]
  %v1315 = vld [vmem:[%s2 + $0x460] sm:$0xff]
  %v1316 = vld [vmem:[%s2 + $0x468] sm:$0xff]
  %v1317 = vld [vmem:[%s2 + $0x470] sm:$0xff]
  %v1318 = vld [vmem:[%s2 + $0x478] sm:$0xff]
  %v1319 = vld [vmem:[%s2 + $0x480] sm:$0xff]
  %v1320 = vld [vmem:[%s2 + $0x488] sm:$0xff]
  %v1321 = vld [vmem:[%s2 + $0x490] sm:$0xff]
  %v1322 = vld [vmem:[%s2 + $0x498] sm:$0xff]
  %v1323 = vld [vmem:[%s2 + $0x4a0] sm:$0xff]
  %v1324 = vld [vmem:[%s2 + $0x4a8] sm:$0xff]
  %v1325 = vld [vmem:[%s2 + $0x4b0] sm:$0xff]
  %v1326 = vld [vmem:[%s2 + $0x4b8] sm:$0xff]
  %v1327 = vld [vmem:[%s2 + $0x4c0] sm:$0xff]
  %v1328 = vld [vmem:[%s2 + $0x4c8] sm:$0xff]
  %v1329 = vld [vmem:[%s2 + $0x4d0] sm:$0xff]
  %v1330 = vld [vmem:[%s2 + $0x4d8] sm:$0xff]
  %v1331 = vld [vmem:[%s2 + $0x4e0] sm:$0xff]
  %v1332 = vld [vmem:[%s2 + $0x4e8] sm:$0xff]
  %v1333 = vld [vmem:[%s2 + $0x4f0] sm:$0xff]
  %v1334 = vld [vmem:[%s2 + $0x4f8] sm:$0xff]
  %v1335 = vld [vmem:[%s2 + $0x500] sm:$0xff]
  %v1336 = vld [vmem:[%s2 + $0x508] sm:$0xff]
  %v1337 = vld [vmem:[%s2 + $0x510] sm:$0xff]
  %v1338 = vld [vmem:[%s2 + $0x518] sm:$0xff]
  %v1339 = vld [vmem:[%s2 + $0x520] sm:$0xff]
  %v1340 = vld [vmem:[%s2 + $0x528] sm:$0xff]
  %v1341 = vld [vmem:[%s2 + $0x530] sm:$0xff]
  %v1342 = vld [vmem:[%s2 + $0x538] sm:$0xff]
  %v1343 = vld [vmem:[%s2 + $0x540] sm:$0xff]
  %v1344 = vld [vmem:[%s2 + $0x548] sm:$0xff]
  %v1345 = vld [vmem:[%s2 + $0x550] sm:$0xff]
  %v1346 = vld [vmem:[%s2 + $0x558] sm:$0xff]
  %v1347 = vld [vmem:[%s2 + $0x560] sm:$0xff]
  %v1348 = vld [vmem:[%s2 + $0x568] sm:$0xff]
  %v1349 = vld [vmem:[%s2 + $0x570] sm:$0xff]
  %v1350 = vld [vmem:[%s2 + $0x578] sm:$0xff]
  %v1351 = vld [vmem:[%s2 + $0x580] sm:$0xff]
  %v1352 = vld [vmem:[%s2 + $0x588] sm:$0xff]
  %v1353 = vld [vmem:[%s2 + $0x590] sm:$0xff]
  %v1354 = vld [vmem:[%s2 + $0x598] sm:$0xff]
  %v1355 = vld [vmem:[%s2 + $0x5a0] sm:$0xff]
  %v1356 = vld [vmem:[%s2 + $0x5a8] sm:$0xff]
  %v1357 = vld [vmem:[%s2 + $0x5b0] sm:$0xff]
  %v1358 = vld [vmem:[%s2 + $0x5b8] sm:$0xff]
  %v1359 = vld [vmem:[%s2 + $0x5c0] sm:$0xff]
  %v1360 = vld [vmem:[%s2 + $0x5c8] sm:$0xff]
  %v1361 = vld [vmem:[%s2 + $0x5d0] sm:$0xff]
  %v1362 = vld [vmem:[%s2 + $0x5d8] sm:$0xff]
  %v1363 = vld [vmem:[%s2 + $0x5e0] sm:$0xff]
  %v1364 = vld [vmem:[%s2 + $0x5e8] sm:$0xff]
  %v1365 = vld [vmem:[%s2 + $0x5f0] sm:$0xff]
  %v1366 = vld [vmem:[%s2 + $0x5f8] sm:$0xff]
  %v1367 = vld [vmem:[%s2 + $0x600] sm:$0xff]
  %v1368 = vld [vmem:[%s2 + $0x608] sm:$0xff]
  %v1369 = vld [vmem:[%s2 + $0x610] sm:$0xff]
  %v1370 = vld [vmem:[%s2 + $0x618] sm:$0xff]
  %v1371 = vld [vmem:[%s2 + $0x620] sm:$0xff]
  %v1372 = vld [vmem:[%s2 + $0x628] sm:$0xff]
  %v1373 = vld [vmem:[%s2 + $0x630] sm:$0xff]
  %v1374 = vld [vmem:[%s2 + $0x638] sm:$0xff]
  %v1375 = vld [vmem:[%s2 + $0x640] sm:$0xff]
  %v1376 = vld [vmem:[%s2 + $0x648] sm:$0xff]
  %v1377 = vld [vmem:[%s2 + $0x650] sm:$0xff]
  %v1378 = vld [vmem:[%s2 + $0x658] sm:$0xff]
  %v1379 = vld [vmem:[%s2 + $0x660] sm:$0xff]
  %v1380 = vld [vmem:[%s2 + $0x668] sm:$0xff]
  %v1381 = vld [vmem:[%s2 + $0x670] sm:$0xff]
  %v1382 = vld [vmem:[%s2 + $0x678] sm:$0xff]
  %v1383 = vld [vmem:[%s2 + $0x680] sm:$0xff]
  %v1384 = vld [vmem:[%s2 + $0x688] sm:$0xff]
  %v1385 = vld [vmem:[%s2 + $0x690] sm:$0xff]
  %v1386 = vld [vmem:[%s2 + $0x698] sm:$0xff]
  %v1387 = vld [vmem:[%s2 + $0x6a0] sm:$0xff]
  %v1388 = vld [vmem:[%s2 + $0x6a8] sm:$0xff]
  %v1389 = vld [vmem:[%s2 + $0x6b0] sm:$0xff]
  %v1390 = vld [vmem:[%s2 + $0x6b8] sm:$0xff]
  %v1391 = vld [vmem:[%s2 + $0x6c0] sm:$0xff]
  %v1392 = vld [vmem:[%s2 + $0x6c8] sm:$0xff]
  %v1393 = vld [vmem:[%s2 + $0x6d0] sm:$0xff]
  %v1394 = vld [vmem:[%s2 + $0x6d8] sm:$0xff]
  %v1395 = vld [vmem:[%s2 + $0x6e0] sm:$0xff]
  %v1396 = vld [vmem:[%s2 + $0x6e8] sm:$0xff]
  %v1397 = vld [vmem:[%s2 + $0x6f0] sm:$0xff]
  %v1398 = vld [vmem:[%s2 + $0x6f8] sm:$0xff]
  %v1399 = vld [vmem:[%s2 + $0x700] sm:$0xff]
  %v1400 = vld [vmem:[%s2 + $0x708] sm:$0xff]
  %v1401 = vld [vmem:[%s2 + $0x710] sm:$0xff]
  %v1402 = vld [vmem:[%s2 + $0x718] sm:$0xff]
  %v1403 = vld [vmem:[%s2 + $0x720] sm:$0xff]
  %v1404 = vld [vmem:[%s2 + $0x728] sm:$0xff]
  %v1405 = vld [vmem:[%s2 + $0x730] sm:$0xff]
  %v1406 = vld [vmem:[%s2 + $0x738] sm:$0xff]
  %v1407 = vld [vmem:[%s2 + $0x740] sm:$0xff]
  %v1408 = vld [vmem:[%s2 + $0x748] sm:$0xff]
  %v1409 = vld [vmem:[%s2 + $0x750] sm:$0xff]
  %v1410 = vld [vmem:[%s2 + $0x758] sm:$0xff]
  %v1411 = vld [vmem:[%s2 + $0x760] sm:$0xff]
  %v1412 = vld [vmem:[%s2 + $0x768] sm:$0xff]
  %v1413 = vld [vmem:[%s2 + $0x770] sm:$0xff]
  %v1414 = vld [vmem:[%s2 + $0x778] sm:$0xff]
  %v1415 = vld [vmem:[%s2 + $0x780] sm:$0xff]
  %v1416 = vld [vmem:[%s2 + $0x788] sm:$0xff]
  %v1417 = vld [vmem:[%s2 + $0x790] sm:$0xff]
  %v1418 = vld [vmem:[%s2 + $0x798] sm:$0xff]
  %v1419 = vld [vmem:[%s2 + $0x7a0] sm:$0xff]
  %v1420 = vld [vmem:[%s2 + $0x7a8] sm:$0xff]
  %v1421 = vld [vmem:[%s2 + $0x7b0] sm:$0xff]
  %v1422 = vld [vmem:[%s2 + $0x7b8] sm:$0xff]
  %v1423 = vld [vmem:[%s2 + $0x7c0] sm:$0xff]
  %v1424 = vld [vmem:[%s2 + $0x7c8] sm:$0xff]
  %v1425 = vld [vmem:[%s2 + $0x7d0] sm:$0xff]
  %v1426 = vld [vmem:[%s2 + $0x7d8] sm:$0xff]
  %v1427 = vld [vmem:[%s2 + $0x7e0] sm:$0xff]
  %v1428 = vld [vmem:[%s2 + $0x7e8] sm:$0xff]
  %v1429 = vld [vmem:[%s2 + $0x7f0] sm:$0xff]
  %v1430 = vld [vmem:[%s2 + $0x7f8] sm:$0xff]
  %v1431 = vld [vmem:[%s3] sm:$0xff]
  %v1432 = vld [vmem:[%s3 + $0x8] sm:$0xff]
  %v1433 = vld [vmem:[%s3 + $0x10] sm:$0xff]
  %v1434 = vld [vmem:[%s3 + $0x18] sm:$0xff]
  %v1435 = vld [vmem:[%s3 + $0x20] sm:$0xff]
  %v1436 = vld [vmem:[%s3 + $0x28] sm:$0xff]
  %v1437 = vld [vmem:[%s3 + $0x30] sm:$0xff]
  %v1438 = vld [vmem:[%s3 + $0x38] sm:$0xff]
  %v1439 = vld [vmem:[%s3 + $0x40] sm:$0xff]
  %v1440 = vld [vmem:[%s3 + $0x48] sm:$0xff]
  %v1441 = vld [vmem:[%s3 + $0x50] sm:$0xff]
  %v1442 = vld [vmem:[%s3 + $0x58] sm:$0xff]
  %v1443 = vld [vmem:[%s3 + $0x60] sm:$0xff]
  %v1444 = vld [vmem:[%s3 + $0x68] sm:$0xff]
  %v1445 = vld [vmem:[%s3 + $0x70] sm:$0xff]
  %v1446 = vld [vmem:[%s3 + $0x78] sm:$0xff]
  %v1447 = vld [vmem:[%s3 + $0x80] sm:$0xff]
  %v1448 = vld [vmem:[%s3 + $0x88] sm:$0xff]
  %v1449 = vld [vmem:[%s3 + $0x90] sm:$0xff]
  %v1450 = vld [vmem:[%s3 + $0x98] sm:$0xff]
  %v1451 = vld [vmem:[%s3 + $0xa0] sm:$0xff]
  %v1452 = vld [vmem:[%s3 + $0xa8] sm:$0xff]
  %v1453 = vld [vmem:[%s3 + $0xb0] sm:$0xff]
  %v1454 = vld [vmem:[%s3 + $0xb8] sm:$0xff]
  %v1455 = vld [vmem:[%s3 + $0xc0] sm:$0xff]
  %v1456 = vld [vmem:[%s3 + $0xc8] sm:$0xff]
  %v1457 = vld [vmem:[%s3 + $0xd0] sm:$0xff]
  %v1458 = vld [vmem:[%s3 + $0xd8] sm:$0xff]
  %v1459 = vld [vmem:[%s3 + $0xe0] sm:$0xff]
  %v1460 = vld [vmem:[%s3 + $0xe8] sm:$0xff]
  %v1461 = vld [vmem:[%s3 + $0xf0] sm:$0xff]
  %v1462 = vld [vmem:[%s3 + $0xf8] sm:$0xff]
  %1464 = vset.pattern.permute.xlu0 0
  %1465 = vperm.xlu0 %1464, %v1431
  %v1466 = vpop.permute.xlu0 %1465
  %1469 = vset.pattern.permute.xlu0 0
  %1470 = vperm.xlu0 %1469, %v1432
  %v1471 = vpop.permute.xlu0 %1470
  %1474 = vset.pattern.permute.xlu0 0
  %1475 = vperm.xlu0 %1474, %v1433
  %v1476 = vpop.permute.xlu0 %1475
  %1479 = vset.pattern.permute.xlu0 0
  %1480 = vperm.xlu0 %1479, %v1434
  %v1481 = vpop.permute.xlu0 %1480
  %1484 = vset.pattern.permute.xlu0 0
  %1485 = vperm.xlu0 %1484, %v1435
  %v1486 = vpop.permute.xlu0 %1485
  %1489 = vset.pattern.permute.xlu0 0
  %1490 = vperm.xlu0 %1489, %v1436
  %v1491 = vpop.permute.xlu0 %1490
  %1494 = vset.pattern.permute.xlu0 0
  %1495 = vperm.xlu0 %1494, %v1437
  %v1496 = vpop.permute.xlu0 %1495
  %1499 = vset.pattern.permute.xlu0 0
  %1500 = vperm.xlu0 %1499, %v1438
  %v1501 = vpop.permute.xlu0 %1500
  %1504 = vset.pattern.permute.xlu0 0
  %1505 = vperm.xlu0 %1504, %v1439
  %v1506 = vpop.permute.xlu0 %1505
  %1509 = vset.pattern.permute.xlu0 0
  %1510 = vperm.xlu0 %1509, %v1440
  %v1511 = vpop.permute.xlu0 %1510
  %1514 = vset.pattern.permute.xlu0 0
  %1515 = vperm.xlu0 %1514, %v1441
  %v1516 = vpop.permute.xlu0 %1515
  %1519 = vset.pattern.permute.xlu0 0
  %1520 = vperm.xlu0 %1519, %v1442
  %v1521 = vpop.permute.xlu0 %1520
  %1524 = vset.pattern.permute.xlu0 0
  %1525 = vperm.xlu0 %1524, %v1443
  %v1526 = vpop.permute.xlu0 %1525
  %1529 = vset.pattern.permute.xlu0 0
  %1530 = vperm.xlu0 %1529, %v1444
  %v1531 = vpop.permute.xlu0 %1530
  %1534 = vset.pattern.permute.xlu0 0
  %1535 = vperm.xlu0 %1534, %v1445
  %v1536 = vpop.permute.xlu0 %1535
  %1539 = vset.pattern.permute.xlu0 0
  %1540 = vperm.xlu0 %1539, %v1446
  %v1541 = vpop.permute.xlu0 %1540
  %1544 = vset.pattern.permute.xlu0 0
  %1545 = vperm.xlu0 %1544, %v1447
  %v1546 = vpop.permute.xlu0 %1545
  %1549 = vset.pattern.permute.xlu0 0
  %1550 = vperm.xlu0 %1549, %v1448
  %v1551 = vpop.permute.xlu0 %1550
  %1554 = vset.pattern.permute.xlu0 0
  %1555 = vperm.xlu0 %1554, %v1449
  %v1556 = vpop.permute.xlu0 %1555
  %1559 = vset.pattern.permute.xlu0 0
  %1560 = vperm.xlu0 %1559, %v1450
  %v1561 = vpop.permute.xlu0 %1560
  %1564 = vset.pattern.permute.xlu0 0
  %1565 = vperm.xlu0 %1564, %v1451
  %v1566 = vpop.permute.xlu0 %1565
  %1569 = vset.pattern.permute.xlu0 0
  %1570 = vperm.xlu0 %1569, %v1452
  %v1571 = vpop.permute.xlu0 %1570
  %1574 = vset.pattern.permute.xlu0 0
  %1575 = vperm.xlu0 %1574, %v1453
  %v1576 = vpop.permute.xlu0 %1575
  %1579 = vset.pattern.permute.xlu0 0
  %1580 = vperm.xlu0 %1579, %v1454
  %v1581 = vpop.permute.xlu0 %1580
  %1584 = vset.pattern.permute.xlu0 0
  %1585 = vperm.xlu0 %1584, %v1455
  %v1586 = vpop.permute.xlu0 %1585
  %1589 = vset.pattern.permute.xlu0 0
  %1590 = vperm.xlu0 %1589, %v1456
  %v1591 = vpop.permute.xlu0 %1590
  %1594 = vset.pattern.permute.xlu0 0
  %1595 = vperm.xlu0 %1594, %v1457
  %v1596 = vpop.permute.xlu0 %1595
  %1599 = vset.pattern.permute.xlu0 0
  %1600 = vperm.xlu0 %1599, %v1458
  %v1601 = vpop.permute.xlu0 %1600
  %1604 = vset.pattern.permute.xlu0 0
  %1605 = vperm.xlu0 %1604, %v1459
  %v1606 = vpop.permute.xlu0 %1605
  %1609 = vset.pattern.permute.xlu0 0
  %1610 = vperm.xlu0 %1609, %v1460
  %v1611 = vpop.permute.xlu0 %1610
  %1614 = vset.pattern.permute.xlu0 0
  %1615 = vperm.xlu0 %1614, %v1461
  %v1616 = vpop.permute.xlu0 %1615
  %1619 = vset.pattern.permute.xlu0 0
  %1620 = vperm.xlu0 %1619, %v1462
  %v1621 = vpop.permute.xlu0 %1620
  %1623 = vmatpush.msra.mxu0 %v1062
  %1624 = vmatpush.msra.mxu0 %v1061
  %1625 = vmatpush.msra.mxu0 %v1060
  %1626 = vmatpush.msra.mxu0 %v1059
  %1627 = vmatpush.msra.mxu0 %v1058
  %1628 = vmatpush.msra.mxu0 %v1057
  %1629 = vmatpush.msra.mxu0 %v1056
  %1630 = vmatpush.msra.mxu0 %v1055
  %1631 = vmatpush.msra.mxu0 %v1054
  %1632 = vmatpush.msra.mxu0 %v1053
  %1633 = vmatpush.msra.mxu0 %v1052
  %1634 = vmatpush.msra.mxu0 %v1051
  %1635 = vmatpush.msra.mxu0 %v1050
  %1636 = vmatpush.msra.mxu0 %v1049
  %1637 = vmatpush.msra.mxu0 %v1048
  %1638 = vmatpush.msra.mxu0 %v1047
  %1639 = vmatmul.f32.gmra.mxu0 %v1175
  %v1640 = vpop.f32.mrf.mxu0
  %v1641 = vadd.f32 %v1466, %v1640
  %1642 = vmatmul.f32.gmra.mxu0 %v1183
  %v1643 = vpop.f32.mrf.mxu0
  %v1644 = vadd.f32 %v1471, %v1643
  %1645 = vmatmul.f32.gmra.mxu0 %v1191
  %v1646 = vpop.f32.mrf.mxu0
  %v1647 = vadd.f32 %v1476, %v1646
  %1648 = vmatmul.f32.gmra.mxu0 %v1199
  %v1649 = vpop.f32.mrf.mxu0
  %v1650 = vadd.f32 %v1481, %v1649
  %1651 = vmatmul.f32.gmra.mxu0 %v1207
  %v1652 = vpop.f32.mrf.mxu0
  %v1653 = vadd.f32 %v1486, %v1652
  %1654 = vmatmul.f32.gmra.mxu0 %v1215
  %v1655 = vpop.f32.mrf.mxu0
  %v1656 = vadd.f32 %v1491, %v1655
  %1657 = vmatmul.f32.gmra.mxu0 %v1223
  %v1658 = vpop.f32.mrf.mxu0
  %v1659 = vadd.f32 %v1496, %v1658
  %1660 = vmatmul.f32.gmra.mxu0 %v1231
  %v1661 = vpop.f32.mrf.mxu0
  %v1662 = vadd.f32 %v1501, %v1661
  %1663 = vmatmul.f32.gmra.mxu0 %v1239
  %v1664 = vpop.f32.mrf.mxu0
  %v1665 = vadd.f32 %v1506, %v1664
  %1666 = vmatmul.f32.gmra.mxu0 %v1247
  %v1667 = vpop.f32.mrf.mxu0
  %v1668 = vadd.f32 %v1511, %v1667
  %1669 = vmatmul.f32.gmra.mxu0 %v1255
  %v1670 = vpop.f32.mrf.mxu0
  %v1671 = vadd.f32 %v1516, %v1670
  %1672 = vmatmul.f32.gmra.mxu0 %v1263
  %v1673 = vpop.f32.mrf.mxu0
  %v1674 = vadd.f32 %v1521, %v1673
  %1675 = vmatmul.f32.gmra.mxu0 %v1271
  %v1676 = vpop.f32.mrf.mxu0
  %v1677 = vadd.f32 %v1526, %v1676
  %1678 = vmatmul.f32.gmra.mxu0 %v1279
  %v1679 = vpop.f32.mrf.mxu0
  %v1680 = vadd.f32 %v1531, %v1679
  %1681 = vmatmul.f32.gmra.mxu0 %v1287
  %v1682 = vpop.f32.mrf.mxu0
  %v1683 = vadd.f32 %v1536, %v1682
  %1684 = vmatmul.f32.gmra.mxu0 %v1295
  %v1685 = vpop.f32.mrf.mxu0
  %v1686 = vadd.f32 %v1541, %v1685
  %1687 = vmatmul.f32.gmra.mxu0 %v1303
  %v1688 = vpop.f32.mrf.mxu0
  %v1689 = vadd.f32 %v1546, %v1688
  %1690 = vmatmul.f32.gmra.mxu0 %v1311
  %v1691 = vpop.f32.mrf.mxu0
  %v1692 = vadd.f32 %v1551, %v1691
  %1693 = vmatmul.f32.gmra.mxu0 %v1319
  %v1694 = vpop.f32.mrf.mxu0
  %v1695 = vadd.f32 %v1556, %v1694
  %1696 = vmatmul.f32.gmra.mxu0 %v1327
  %v1697 = vpop.f32.mrf.mxu0
  %v1698 = vadd.f32 %v1561, %v1697
  %1699 = vmatmul.f32.gmra.mxu0 %v1335
  %v1700 = vpop.f32.mrf.mxu0
  %v1701 = vadd.f32 %v1566, %v1700
  %1702 = vmatmul.f32.gmra.mxu0 %v1343
  %v1703 = vpop.f32.mrf.mxu0
  %v1704 = vadd.f32 %v1571, %v1703
  %1705 = vmatmul.f32.gmra.mxu0 %v1351
  %v1706 = vpop.f32.mrf.mxu0
  %v1707 = vadd.f32 %v1576, %v1706
  %1708 = vmatmul.f32.gmra.mxu0 %v1359
  %v1709 = vpop.f32.mrf.mxu0
  %v1710 = vadd.f32 %v1581, %v1709
  %1711 = vmatmul.f32.gmra.mxu0 %v1367
  %v1712 = vpop.f32.mrf.mxu0
  %v1713 = vadd.f32 %v1586, %v1712
  %1714 = vmatmul.f32.gmra.mxu0 %v1375
  %v1715 = vpop.f32.mrf.mxu0
  %v1716 = vadd.f32 %v1591, %v1715
  %1717 = vmatmul.f32.gmra.mxu0 %v1383
  %v1718 = vpop.f32.mrf.mxu0
  %v1719 = vadd.f32 %v1596, %v1718
  %1720 = vmatmul.f32.gmra.mxu0 %v1391
  %v1721 = vpop.f32.mrf.mxu0
  %v1722 = vadd.f32 %v1601, %v1721
  %1723 = vmatmul.f32.gmra.mxu0 %v1399
  %v1724 = vpop.f32.mrf.mxu0
  %v1725 = vadd.f32 %v1606, %v1724
  %1726 = vmatmul.f32.gmra.mxu0 %v1407
  %v1727 = vpop.f32.mrf.mxu0
  %v1728 = vadd.f32 %v1611, %v1727
  %1729 = vmatmul.f32.gmra.mxu0 %v1415
  %v1730 = vpop.f32.mrf.mxu0
  %v1731 = vadd.f32 %v1616, %v1730
  %1732 = vmatmul.f32.gmra.mxu0 %v1423
  %v1733 = vpop.f32.mrf.mxu0
  %v1734 = vadd.f32 %v1621, %v1733
  %1735 = vdwg.mxu0
  %1736 = vmatpush.msra.mxu0 %v1078
  %1737 = vmatpush.msra.mxu0 %v1077
  %1738 = vmatpush.msra.mxu0 %v1076
  %1739 = vmatpush.msra.mxu0 %v1075
  %1740 = vmatpush.msra.mxu0 %v1074
  %1741 = vmatpush.msra.mxu0 %v1073
  %1742 = vmatpush.msra.mxu0 %v1072
  %1743 = vmatpush.msra.mxu0 %v1071
  %1744 = vmatpush.msra.mxu0 %v1070
  %1745 = vmatpush.msra.mxu0 %v1069
  %1746 = vmatpush.msra.mxu0 %v1068
  %1747 = vmatpush.msra.mxu0 %v1067
  %1748 = vmatpush.msra.mxu0 %v1066
  %1749 = vmatpush.msra.mxu0 %v1065
  %1750 = vmatpush.msra.mxu0 %v1064
  %1751 = vmatpush.msra.mxu0 %v1063
  %1752 = vmatmul.f32.gmra.mxu0 %v1176
  %v1753 = vpop.f32.mrf.mxu0
  %v1754 = vadd.f32 %v1641, %v1753
  %1755 = vmatmul.f32.gmra.mxu0 %v1184
  %v1756 = vpop.f32.mrf.mxu0
  %v1757 = vadd.f32 %v1644, %v1756
  %1758 = vmatmul.f32.gmra.mxu0 %v1192
  %v1759 = vpop.f32.mrf.mxu0
  %v1760 = vadd.f32 %v1647, %v1759
  %1761 = vmatmul.f32.gmra.mxu0 %v1200
  %v1762 = vpop.f32.mrf.mxu0
  %v1763 = vadd.f32 %v1650, %v1762
  %1764 = vmatmul.f32.gmra.mxu0 %v1208
  %v1765 = vpop.f32.mrf.mxu0
  %v1766 = vadd.f32 %v1653, %v1765
  %1767 = vmatmul.f32.gmra.mxu0 %v1216
  %v1768 = vpop.f32.mrf.mxu0
  %v1769 = vadd.f32 %v1656, %v1768
  %1770 = vmatmul.f32.gmra.mxu0 %v1224
  %v1771 = vpop.f32.mrf.mxu0
  %v1772 = vadd.f32 %v1659, %v1771
  %1773 = vmatmul.f32.gmra.mxu0 %v1232
  %v1774 = vpop.f32.mrf.mxu0
  %v1775 = vadd.f32 %v1662, %v1774
  %1776 = vmatmul.f32.gmra.mxu0 %v1240
  %v1777 = vpop.f32.mrf.mxu0
  %v1778 = vadd.f32 %v1665, %v1777
  %1779 = vmatmul.f32.gmra.mxu0 %v1248
  %v1780 = vpop.f32.mrf.mxu0
  %v1781 = vadd.f32 %v1668, %v1780
  %1782 = vmatmul.f32.gmra.mxu0 %v1256
  %v1783 = vpop.f32.mrf.mxu0
  %v1784 = vadd.f32 %v1671, %v1783
  %1785 = vmatmul.f32.gmra.mxu0 %v1264
  %v1786 = vpop.f32.mrf.mxu0
  %v1787 = vadd.f32 %v1674, %v1786
  %1788 = vmatmul.f32.gmra.mxu0 %v1272
  %v1789 = vpop.f32.mrf.mxu0
  %v1790 = vadd.f32 %v1677, %v1789
  %1791 = vmatmul.f32.gmra.mxu0 %v1280
  %v1792 = vpop.f32.mrf.mxu0
  %v1793 = vadd.f32 %v1680, %v1792
  %1794 = vmatmul.f32.gmra.mxu0 %v1288
  %v1795 = vpop.f32.mrf.mxu0
  %v1796 = vadd.f32 %v1683, %v1795
  %1797 = vmatmul.f32.gmra.mxu0 %v1296
  %v1798 = vpop.f32.mrf.mxu0
  %v1799 = vadd.f32 %v1686, %v1798
  %1800 = vmatmul.f32.gmra.mxu0 %v1304
  %v1801 = vpop.f32.mrf.mxu0
  %v1802 = vadd.f32 %v1689, %v1801
  %1803 = vmatmul.f32.gmra.mxu0 %v1312
  %v1804 = vpop.f32.mrf.mxu0
  %v1805 = vadd.f32 %v1692, %v1804
  %1806 = vmatmul.f32.gmra.mxu0 %v1320
  %v1807 = vpop.f32.mrf.mxu0
  %v1808 = vadd.f32 %v1695, %v1807
  %1809 = vmatmul.f32.gmra.mxu0 %v1328
  %v1810 = vpop.f32.mrf.mxu0
  %v1811 = vadd.f32 %v1698, %v1810
  %1812 = vmatmul.f32.gmra.mxu0 %v1336
  %v1813 = vpop.f32.mrf.mxu0
  %v1814 = vadd.f32 %v1701, %v1813
  %1815 = vmatmul.f32.gmra.mxu0 %v1344
  %v1816 = vpop.f32.mrf.mxu0
  %v1817 = vadd.f32 %v1704, %v1816
  %1818 = vmatmul.f32.gmra.mxu0 %v1352
  %v1819 = vpop.f32.mrf.mxu0
  %v1820 = vadd.f32 %v1707, %v1819
  %1821 = vmatmul.f32.gmra.mxu0 %v1360
  %v1822 = vpop.f32.mrf.mxu0
  %v1823 = vadd.f32 %v1710, %v1822
  %1824 = vmatmul.f32.gmra.mxu0 %v1368
  %v1825 = vpop.f32.mrf.mxu0
  %v1826 = vadd.f32 %v1713, %v1825
  %1827 = vmatmul.f32.gmra.mxu0 %v1376
  %v1828 = vpop.f32.mrf.mxu0
  %v1829 = vadd.f32 %v1716, %v1828
  %1830 = vmatmul.f32.gmra.mxu0 %v1384
  %v1831 = vpop.f32.mrf.mxu0
  %v1832 = vadd.f32 %v1719, %v1831
  %1833 = vmatmul.f32.gmra.mxu0 %v1392
  %v1834 = vpop.f32.mrf.mxu0
  %v1835 = vadd.f32 %v1722, %v1834
  %1836 = vmatmul.f32.gmra.mxu0 %v1400
  %v1837 = vpop.f32.mrf.mxu0
  %v1838 = vadd.f32 %v1725, %v1837
  %1839 = vmatmul.f32.gmra.mxu0 %v1408
  %v1840 = vpop.f32.mrf.mxu0
  %v1841 = vadd.f32 %v1728, %v1840
  %1842 = vmatmul.f32.gmra.mxu0 %v1416
  %v1843 = vpop.f32.mrf.mxu0
  %v1844 = vadd.f32 %v1731, %v1843
  %1845 = vmatmul.f32.gmra.mxu0 %v1424
  %v1846 = vpop.f32.mrf.mxu0
  %v1847 = vadd.f32 %v1734, %v1846
  %1848 = vdwg.mxu0
  %1849 = vmatpush.msra.mxu0 %v1094
  %1850 = vmatpush.msra.mxu0 %v1093
  %1851 = vmatpush.msra.mxu0 %v1092
  %1852 = vmatpush.msra.mxu0 %v1091
  %1853 = vmatpush.msra.mxu0 %v1090
  %1854 = vmatpush.msra.mxu0 %v1089
  %1855 = vmatpush.msra.mxu0 %v1088
  %1856 = vmatpush.msra.mxu0 %v1087
  %1857 = vmatpush.msra.mxu0 %v1086
  %1858 = vmatpush.msra.mxu0 %v1085
  %1859 = vmatpush.msra.mxu0 %v1084
  %1860 = vmatpush.msra.mxu0 %v1083
  %1861 = vmatpush.msra.mxu0 %v1082
  %1862 = vmatpush.msra.mxu0 %v1081
  %1863 = vmatpush.msra.mxu0 %v1080
  %1864 = vmatpush.msra.mxu0 %v1079
  %1865 = vmatmul.f32.gmra.mxu0 %v1177
  %v1866 = vpop.f32.mrf.mxu0
  %v1867 = vadd.f32 %v1754, %v1866
  %1868 = vmatmul.f32.gmra.mxu0 %v1185
  %v1869 = vpop.f32.mrf.mxu0
  %v1870 = vadd.f32 %v1757, %v1869
  %1871 = vmatmul.f32.gmra.mxu0 %v1193
  %v1872 = vpop.f32.mrf.mxu0
  %v1873 = vadd.f32 %v1760, %v1872
  %1874 = vmatmul.f32.gmra.mxu0 %v1201
  %v1875 = vpop.f32.mrf.mxu0
  %v1876 = vadd.f32 %v1763, %v1875
  %1877 = vmatmul.f32.gmra.mxu0 %v1209
  %v1878 = vpop.f32.mrf.mxu0
  %v1879 = vadd.f32 %v1766, %v1878
  %1880 = vmatmul.f32.gmra.mxu0 %v1217
  %v1881 = vpop.f32.mrf.mxu0
  %v1882 = vadd.f32 %v1769, %v1881
  %1883 = vmatmul.f32.gmra.mxu0 %v1225
  %v1884 = vpop.f32.mrf.mxu0
  %v1885 = vadd.f32 %v1772, %v1884
  %1886 = vmatmul.f32.gmra.mxu0 %v1233
  %v1887 = vpop.f32.mrf.mxu0
  %v1888 = vadd.f32 %v1775, %v1887
  %1889 = vmatmul.f32.gmra.mxu0 %v1241
  %v1890 = vpop.f32.mrf.mxu0
  %v1891 = vadd.f32 %v1778, %v1890
  %1892 = vmatmul.f32.gmra.mxu0 %v1249
  %v1893 = vpop.f32.mrf.mxu0
  %v1894 = vadd.f32 %v1781, %v1893
  %1895 = vmatmul.f32.gmra.mxu0 %v1257
  %v1896 = vpop.f32.mrf.mxu0
  %v1897 = vadd.f32 %v1784, %v1896
  %1898 = vmatmul.f32.gmra.mxu0 %v1265
  %v1899 = vpop.f32.mrf.mxu0
  %v1900 = vadd.f32 %v1787, %v1899
  %1901 = vmatmul.f32.gmra.mxu0 %v1273
  %v1902 = vpop.f32.mrf.mxu0
  %v1903 = vadd.f32 %v1790, %v1902
  %1904 = vmatmul.f32.gmra.mxu0 %v1281
  %v1905 = vpop.f32.mrf.mxu0
  %v1906 = vadd.f32 %v1793, %v1905
  %1907 = vmatmul.f32.gmra.mxu0 %v1289
  %v1908 = vpop.f32.mrf.mxu0
  %v1909 = vadd.f32 %v1796, %v1908
  %1910 = vmatmul.f32.gmra.mxu0 %v1297
  %v1911 = vpop.f32.mrf.mxu0
  %v1912 = vadd.f32 %v1799, %v1911
  %1913 = vmatmul.f32.gmra.mxu0 %v1305
  %v1914 = vpop.f32.mrf.mxu0
  %v1915 = vadd.f32 %v1802, %v1914
  %1916 = vmatmul.f32.gmra.mxu0 %v1313
  %v1917 = vpop.f32.mrf.mxu0
  %v1918 = vadd.f32 %v1805, %v1917
  %1919 = vmatmul.f32.gmra.mxu0 %v1321
  %v1920 = vpop.f32.mrf.mxu0
  %v1921 = vadd.f32 %v1808, %v1920
  %1922 = vmatmul.f32.gmra.mxu0 %v1329
  %v1923 = vpop.f32.mrf.mxu0
  %v1924 = vadd.f32 %v1811, %v1923
  %1925 = vmatmul.f32.gmra.mxu0 %v1337
  %v1926 = vpop.f32.mrf.mxu0
  %v1927 = vadd.f32 %v1814, %v1926
  %1928 = vmatmul.f32.gmra.mxu0 %v1345
  %v1929 = vpop.f32.mrf.mxu0
  %v1930 = vadd.f32 %v1817, %v1929
  %1931 = vmatmul.f32.gmra.mxu0 %v1353
  %v1932 = vpop.f32.mrf.mxu0
  %v1933 = vadd.f32 %v1820, %v1932
  %1934 = vmatmul.f32.gmra.mxu0 %v1361
  %v1935 = vpop.f32.mrf.mxu0
  %v1936 = vadd.f32 %v1823, %v1935
  %1937 = vmatmul.f32.gmra.mxu0 %v1369
  %v1938 = vpop.f32.mrf.mxu0
  %v1939 = vadd.f32 %v1826, %v1938
  %1940 = vmatmul.f32.gmra.mxu0 %v1377
  %v1941 = vpop.f32.mrf.mxu0
  %v1942 = vadd.f32 %v1829, %v1941
  %1943 = vmatmul.f32.gmra.mxu0 %v1385
  %v1944 = vpop.f32.mrf.mxu0
  %v1945 = vadd.f32 %v1832, %v1944
  %1946 = vmatmul.f32.gmra.mxu0 %v1393
  %v1947 = vpop.f32.mrf.mxu0
  %v1948 = vadd.f32 %v1835, %v1947
  %1949 = vmatmul.f32.gmra.mxu0 %v1401
  %v1950 = vpop.f32.mrf.mxu0
  %v1951 = vadd.f32 %v1838, %v1950
  %1952 = vmatmul.f32.gmra.mxu0 %v1409
  %v1953 = vpop.f32.mrf.mxu0
  %v1954 = vadd.f32 %v1841, %v1953
  %1955 = vmatmul.f32.gmra.mxu0 %v1417
  %v1956 = vpop.f32.mrf.mxu0
  %v1957 = vadd.f32 %v1844, %v1956
  %1958 = vmatmul.f32.gmra.mxu0 %v1425
  %v1959 = vpop.f32.mrf.mxu0
  %v1960 = vadd.f32 %v1847, %v1959
  %1961 = vdwg.mxu0
  %1962 = vmatpush.msra.mxu0 %v1110
  %1963 = vmatpush.msra.mxu0 %v1109
  %1964 = vmatpush.msra.mxu0 %v1108
  %1965 = vmatpush.msra.mxu0 %v1107
  %1966 = vmatpush.msra.mxu0 %v1106
  %1967 = vmatpush.msra.mxu0 %v1105
  %1968 = vmatpush.msra.mxu0 %v1104
  %1969 = vmatpush.msra.mxu0 %v1103
  %1970 = vmatpush.msra.mxu0 %v1102
  %1971 = vmatpush.msra.mxu0 %v1101
  %1972 = vmatpush.msra.mxu0 %v1100
  %1973 = vmatpush.msra.mxu0 %v1099
  %1974 = vmatpush.msra.mxu0 %v1098
  %1975 = vmatpush.msra.mxu0 %v1097
  %1976 = vmatpush.msra.mxu0 %v1096
  %1977 = vmatpush.msra.mxu0 %v1095
  %1978 = vmatmul.f32.gmra.mxu0 %v1178
  %v1979 = vpop.f32.mrf.mxu0
  %v1980 = vadd.f32 %v1867, %v1979
  %1981 = vmatmul.f32.gmra.mxu0 %v1186
  %v1982 = vpop.f32.mrf.mxu0
  %v1983 = vadd.f32 %v1870, %v1982
  %1984 = vmatmul.f32.gmra.mxu0 %v1194
  %v1985 = vpop.f32.mrf.mxu0
  %v1986 = vadd.f32 %v1873, %v1985
  %1987 = vmatmul.f32.gmra.mxu0 %v1202
  %v1988 = vpop.f32.mrf.mxu0
  %v1989 = vadd.f32 %v1876, %v1988
  %1990 = vmatmul.f32.gmra.mxu0 %v1210
  %v1991 = vpop.f32.mrf.mxu0
  %v1992 = vadd.f32 %v1879, %v1991
  %1993 = vmatmul.f32.gmra.mxu0 %v1218
  %v1994 = vpop.f32.mrf.mxu0
  %v1995 = vadd.f32 %v1882, %v1994
  %1996 = vmatmul.f32.gmra.mxu0 %v1226
  %v1997 = vpop.f32.mrf.mxu0
  %v1998 = vadd.f32 %v1885, %v1997
  %1999 = vmatmul.f32.gmra.mxu0 %v1234
  %v2000 = vpop.f32.mrf.mxu0
  %v2001 = vadd.f32 %v1888, %v2000
  %2002 = vmatmul.f32.gmra.mxu0 %v1242
  %v2003 = vpop.f32.mrf.mxu0
  %v2004 = vadd.f32 %v1891, %v2003
  %2005 = vmatmul.f32.gmra.mxu0 %v1250
  %v2006 = vpop.f32.mrf.mxu0
  %v2007 = vadd.f32 %v1894, %v2006
  %2008 = vmatmul.f32.gmra.mxu0 %v1258
  %v2009 = vpop.f32.mrf.mxu0
  %v2010 = vadd.f32 %v1897, %v2009
  %2011 = vmatmul.f32.gmra.mxu0 %v1266
  %v2012 = vpop.f32.mrf.mxu0
  %v2013 = vadd.f32 %v1900, %v2012
  %2014 = vmatmul.f32.gmra.mxu0 %v1274
  %v2015 = vpop.f32.mrf.mxu0
  %v2016 = vadd.f32 %v1903, %v2015
  %2017 = vmatmul.f32.gmra.mxu0 %v1282
  %v2018 = vpop.f32.mrf.mxu0
  %v2019 = vadd.f32 %v1906, %v2018
  %2020 = vmatmul.f32.gmra.mxu0 %v1290
  %v2021 = vpop.f32.mrf.mxu0
  %v2022 = vadd.f32 %v1909, %v2021
  %2023 = vmatmul.f32.gmra.mxu0 %v1298
  %v2024 = vpop.f32.mrf.mxu0
  %v2025 = vadd.f32 %v1912, %v2024
  %2026 = vmatmul.f32.gmra.mxu0 %v1306
  %v2027 = vpop.f32.mrf.mxu0
  %v2028 = vadd.f32 %v1915, %v2027
  %2029 = vmatmul.f32.gmra.mxu0 %v1314
  %v2030 = vpop.f32.mrf.mxu0
  %v2031 = vadd.f32 %v1918, %v2030
  %2032 = vmatmul.f32.gmra.mxu0 %v1322
  %v2033 = vpop.f32.mrf.mxu0
  %v2034 = vadd.f32 %v1921, %v2033
  %2035 = vmatmul.f32.gmra.mxu0 %v1330
  %v2036 = vpop.f32.mrf.mxu0
  %v2037 = vadd.f32 %v1924, %v2036
  %2038 = vmatmul.f32.gmra.mxu0 %v1338
  %v2039 = vpop.f32.mrf.mxu0
  %v2040 = vadd.f32 %v1927, %v2039
  %2041 = vmatmul.f32.gmra.mxu0 %v1346
  %v2042 = vpop.f32.mrf.mxu0
  %v2043 = vadd.f32 %v1930, %v2042
  %2044 = vmatmul.f32.gmra.mxu0 %v1354
  %v2045 = vpop.f32.mrf.mxu0
  %v2046 = vadd.f32 %v1933, %v2045
  %2047 = vmatmul.f32.gmra.mxu0 %v1362
  %v2048 = vpop.f32.mrf.mxu0
  %v2049 = vadd.f32 %v1936, %v2048
  %2050 = vmatmul.f32.gmra.mxu0 %v1370
  %v2051 = vpop.f32.mrf.mxu0
  %v2052 = vadd.f32 %v1939, %v2051
  %2053 = vmatmul.f32.gmra.mxu0 %v1378
  %v2054 = vpop.f32.mrf.mxu0
  %v2055 = vadd.f32 %v1942, %v2054
  %2056 = vmatmul.f32.gmra.mxu0 %v1386
  %v2057 = vpop.f32.mrf.mxu0
  %v2058 = vadd.f32 %v1945, %v2057
  %2059 = vmatmul.f32.gmra.mxu0 %v1394
  %v2060 = vpop.f32.mrf.mxu0
  %v2061 = vadd.f32 %v1948, %v2060
  %2062 = vmatmul.f32.gmra.mxu0 %v1402
  %v2063 = vpop.f32.mrf.mxu0
  %v2064 = vadd.f32 %v1951, %v2063
  %2065 = vmatmul.f32.gmra.mxu0 %v1410
  %v2066 = vpop.f32.mrf.mxu0
  %v2067 = vadd.f32 %v1954, %v2066
  %2068 = vmatmul.f32.gmra.mxu0 %v1418
  %v2069 = vpop.f32.mrf.mxu0
  %v2070 = vadd.f32 %v1957, %v2069
  %2071 = vmatmul.f32.gmra.mxu0 %v1426
  %v2072 = vpop.f32.mrf.mxu0
  %v2073 = vadd.f32 %v1960, %v2072
  %2074 = vdwg.mxu0
  %2075 = vmatpush.msra.mxu0 %v1126
  %2076 = vmatpush.msra.mxu0 %v1125
  %2077 = vmatpush.msra.mxu0 %v1124
  %2078 = vmatpush.msra.mxu0 %v1123
  %2079 = vmatpush.msra.mxu0 %v1122
  %2080 = vmatpush.msra.mxu0 %v1121
  %2081 = vmatpush.msra.mxu0 %v1120
  %2082 = vmatpush.msra.mxu0 %v1119
  %2083 = vmatpush.msra.mxu0 %v1118
  %2084 = vmatpush.msra.mxu0 %v1117
  %2085 = vmatpush.msra.mxu0 %v1116
  %2086 = vmatpush.msra.mxu0 %v1115
  %2087 = vmatpush.msra.mxu0 %v1114
  %2088 = vmatpush.msra.mxu0 %v1113
  %2089 = vmatpush.msra.mxu0 %v1112
  %2090 = vmatpush.msra.mxu0 %v1111
  %2091 = vmatmul.f32.gmra.mxu0 %v1179
  %v2092 = vpop.f32.mrf.mxu0
  %v2093 = vadd.f32 %v1980, %v2092
  %2094 = vmatmul.f32.gmra.mxu0 %v1187
  %v2095 = vpop.f32.mrf.mxu0
  %v2096 = vadd.f32 %v1983, %v2095
  %2097 = vmatmul.f32.gmra.mxu0 %v1195
  %v2098 = vpop.f32.mrf.mxu0
  %v2099 = vadd.f32 %v1986, %v2098
  %2100 = vmatmul.f32.gmra.mxu0 %v1203
  %v2101 = vpop.f32.mrf.mxu0
  %v2102 = vadd.f32 %v1989, %v2101
  %2103 = vmatmul.f32.gmra.mxu0 %v1211
  %v2104 = vpop.f32.mrf.mxu0
  %v2105 = vadd.f32 %v1992, %v2104
  %2106 = vmatmul.f32.gmra.mxu0 %v1219
  %v2107 = vpop.f32.mrf.mxu0
  %v2108 = vadd.f32 %v1995, %v2107
  %2109 = vmatmul.f32.gmra.mxu0 %v1227
  %v2110 = vpop.f32.mrf.mxu0
  %v2111 = vadd.f32 %v1998, %v2110
  %2112 = vmatmul.f32.gmra.mxu0 %v1235
  %v2113 = vpop.f32.mrf.mxu0
  %v2114 = vadd.f32 %v2001, %v2113
  %2115 = vmatmul.f32.gmra.mxu0 %v1243
  %v2116 = vpop.f32.mrf.mxu0
  %v2117 = vadd.f32 %v2004, %v2116
  %2118 = vmatmul.f32.gmra.mxu0 %v1251
  %v2119 = vpop.f32.mrf.mxu0
  %v2120 = vadd.f32 %v2007, %v2119
  %2121 = vmatmul.f32.gmra.mxu0 %v1259
  %v2122 = vpop.f32.mrf.mxu0
  %v2123 = vadd.f32 %v2010, %v2122
  %2124 = vmatmul.f32.gmra.mxu0 %v1267
  %v2125 = vpop.f32.mrf.mxu0
  %v2126 = vadd.f32 %v2013, %v2125
  %2127 = vmatmul.f32.gmra.mxu0 %v1275
  %v2128 = vpop.f32.mrf.mxu0
  %v2129 = vadd.f32 %v2016, %v2128
  %2130 = vmatmul.f32.gmra.mxu0 %v1283
  %v2131 = vpop.f32.mrf.mxu0
  %v2132 = vadd.f32 %v2019, %v2131
  %2133 = vmatmul.f32.gmra.mxu0 %v1291
  %v2134 = vpop.f32.mrf.mxu0
  %v2135 = vadd.f32 %v2022, %v2134
  %2136 = vmatmul.f32.gmra.mxu0 %v1299
  %v2137 = vpop.f32.mrf.mxu0
  %v2138 = vadd.f32 %v2025, %v2137
  %2139 = vmatmul.f32.gmra.mxu0 %v1307
  %v2140 = vpop.f32.mrf.mxu0
  %v2141 = vadd.f32 %v2028, %v2140
  %2142 = vmatmul.f32.gmra.mxu0 %v1315
  %v2143 = vpop.f32.mrf.mxu0
  %v2144 = vadd.f32 %v2031, %v2143
  %2145 = vmatmul.f32.gmra.mxu0 %v1323
  %v2146 = vpop.f32.mrf.mxu0
  %v2147 = vadd.f32 %v2034, %v2146
  %2148 = vmatmul.f32.gmra.mxu0 %v1331
  %v2149 = vpop.f32.mrf.mxu0
  %v2150 = vadd.f32 %v2037, %v2149
  %2151 = vmatmul.f32.gmra.mxu0 %v1339
  %v2152 = vpop.f32.mrf.mxu0
  %v2153 = vadd.f32 %v2040, %v2152
  %2154 = vmatmul.f32.gmra.mxu0 %v1347
  %v2155 = vpop.f32.mrf.mxu0
  %v2156 = vadd.f32 %v2043, %v2155
  %2157 = vmatmul.f32.gmra.mxu0 %v1355
  %v2158 = vpop.f32.mrf.mxu0
  %v2159 = vadd.f32 %v2046, %v2158
  %2160 = vmatmul.f32.gmra.mxu0 %v1363
  %v2161 = vpop.f32.mrf.mxu0
  %v2162 = vadd.f32 %v2049, %v2161
  %2163 = vmatmul.f32.gmra.mxu0 %v1371
  %v2164 = vpop.f32.mrf.mxu0
  %v2165 = vadd.f32 %v2052, %v2164
  %2166 = vmatmul.f32.gmra.mxu0 %v1379
  %v2167 = vpop.f32.mrf.mxu0
  %v2168 = vadd.f32 %v2055, %v2167
  %2169 = vmatmul.f32.gmra.mxu0 %v1387
  %v2170 = vpop.f32.mrf.mxu0
  %v2171 = vadd.f32 %v2058, %v2170
  %2172 = vmatmul.f32.gmra.mxu0 %v1395
  %v2173 = vpop.f32.mrf.mxu0
  %v2174 = vadd.f32 %v2061, %v2173
  %2175 = vmatmul.f32.gmra.mxu0 %v1403
  %v2176 = vpop.f32.mrf.mxu0
  %v2177 = vadd.f32 %v2064, %v2176
  %2178 = vmatmul.f32.gmra.mxu0 %v1411
  %v2179 = vpop.f32.mrf.mxu0
  %v2180 = vadd.f32 %v2067, %v2179
  %2181 = vmatmul.f32.gmra.mxu0 %v1419
  %v2182 = vpop.f32.mrf.mxu0
  %v2183 = vadd.f32 %v2070, %v2182
  %2184 = vmatmul.f32.gmra.mxu0 %v1427
  %v2185 = vpop.f32.mrf.mxu0
  %v2186 = vadd.f32 %v2073, %v2185
  %2187 = vdwg.mxu0
  %2188 = vmatpush.msra.mxu0 %v1142
  %2189 = vmatpush.msra.mxu0 %v1141
  %2190 = vmatpush.msra.mxu0 %v1140
  %2191 = vmatpush.msra.mxu0 %v1139
  %2192 = vmatpush.msra.mxu0 %v1138
  %2193 = vmatpush.msra.mxu0 %v1137
  %2194 = vmatpush.msra.mxu0 %v1136
  %2195 = vmatpush.msra.mxu0 %v1135
  %2196 = vmatpush.msra.mxu0 %v1134
  %2197 = vmatpush.msra.mxu0 %v1133
  %2198 = vmatpush.msra.mxu0 %v1132
  %2199 = vmatpush.msra.mxu0 %v1131
  %2200 = vmatpush.msra.mxu0 %v1130
  %2201 = vmatpush.msra.mxu0 %v1129
  %2202 = vmatpush.msra.mxu0 %v1128
  %2203 = vmatpush.msra.mxu0 %v1127
  %2204 = vmatmul.f32.gmra.mxu0 %v1180
  %v2205 = vpop.f32.mrf.mxu0
  %v2206 = vadd.f32 %v2093, %v2205
  %2207 = vmatmul.f32.gmra.mxu0 %v1188
  %v2208 = vpop.f32.mrf.mxu0
  %v2209 = vadd.f32 %v2096, %v2208
  %2210 = vmatmul.f32.gmra.mxu0 %v1196
  %v2211 = vpop.f32.mrf.mxu0
  %v2212 = vadd.f32 %v2099, %v2211
  %2213 = vmatmul.f32.gmra.mxu0 %v1204
  %v2214 = vpop.f32.mrf.mxu0
  %v2215 = vadd.f32 %v2102, %v2214
  %2216 = vmatmul.f32.gmra.mxu0 %v1212
  %v2217 = vpop.f32.mrf.mxu0
  %v2218 = vadd.f32 %v2105, %v2217
  %2219 = vmatmul.f32.gmra.mxu0 %v1220
  %v2220 = vpop.f32.mrf.mxu0
  %v2221 = vadd.f32 %v2108, %v2220
  %2222 = vmatmul.f32.gmra.mxu0 %v1228
  %v2223 = vpop.f32.mrf.mxu0
  %v2224 = vadd.f32 %v2111, %v2223
  %2225 = vmatmul.f32.gmra.mxu0 %v1236
  %v2226 = vpop.f32.mrf.mxu0
  %v2227 = vadd.f32 %v2114, %v2226
  %2228 = vmatmul.f32.gmra.mxu0 %v1244
  %v2229 = vpop.f32.mrf.mxu0
  %v2230 = vadd.f32 %v2117, %v2229
  %2231 = vmatmul.f32.gmra.mxu0 %v1252
  %v2232 = vpop.f32.mrf.mxu0
  %v2233 = vadd.f32 %v2120, %v2232
  %2234 = vmatmul.f32.gmra.mxu0 %v1260
  %v2235 = vpop.f32.mrf.mxu0
  %v2236 = vadd.f32 %v2123, %v2235
  %2237 = vmatmul.f32.gmra.mxu0 %v1268
  %v2238 = vpop.f32.mrf.mxu0
  %v2239 = vadd.f32 %v2126, %v2238
  %2240 = vmatmul.f32.gmra.mxu0 %v1276
  %v2241 = vpop.f32.mrf.mxu0
  %v2242 = vadd.f32 %v2129, %v2241
  %2243 = vmatmul.f32.gmra.mxu0 %v1284
  %v2244 = vpop.f32.mrf.mxu0
  %v2245 = vadd.f32 %v2132, %v2244
  %2246 = vmatmul.f32.gmra.mxu0 %v1292
  %v2247 = vpop.f32.mrf.mxu0
  %v2248 = vadd.f32 %v2135, %v2247
  %2249 = vmatmul.f32.gmra.mxu0 %v1300
  %v2250 = vpop.f32.mrf.mxu0
  %v2251 = vadd.f32 %v2138, %v2250
  %2252 = vmatmul.f32.gmra.mxu0 %v1308
  %v2253 = vpop.f32.mrf.mxu0
  %v2254 = vadd.f32 %v2141, %v2253
  %2255 = vmatmul.f32.gmra.mxu0 %v1316
  %v2256 = vpop.f32.mrf.mxu0
  %v2257 = vadd.f32 %v2144, %v2256
  %2258 = vmatmul.f32.gmra.mxu0 %v1324
  %v2259 = vpop.f32.mrf.mxu0
  %v2260 = vadd.f32 %v2147, %v2259
  %2261 = vmatmul.f32.gmra.mxu0 %v1332
  %v2262 = vpop.f32.mrf.mxu0
  %v2263 = vadd.f32 %v2150, %v2262
  %2264 = vmatmul.f32.gmra.mxu0 %v1340
  %v2265 = vpop.f32.mrf.mxu0
  %v2266 = vadd.f32 %v2153, %v2265
  %2267 = vmatmul.f32.gmra.mxu0 %v1348
  %v2268 = vpop.f32.mrf.mxu0
  %v2269 = vadd.f32 %v2156, %v2268
  %2270 = vmatmul.f32.gmra.mxu0 %v1356
  %v2271 = vpop.f32.mrf.mxu0
  %v2272 = vadd.f32 %v2159, %v2271
  %2273 = vmatmul.f32.gmra.mxu0 %v1364
  %v2274 = vpop.f32.mrf.mxu0
  %v2275 = vadd.f32 %v2162, %v2274
  %2276 = vmatmul.f32.gmra.mxu0 %v1372
  %v2277 = vpop.f32.mrf.mxu0
  %v2278 = vadd.f32 %v2165, %v2277
  %2279 = vmatmul.f32.gmra.mxu0 %v1380
  %v2280 = vpop.f32.mrf.mxu0
  %v2281 = vadd.f32 %v2168, %v2280
  %2282 = vmatmul.f32.gmra.mxu0 %v1388
  %v2283 = vpop.f32.mrf.mxu0
  %v2284 = vadd.f32 %v2171, %v2283
  %2285 = vmatmul.f32.gmra.mxu0 %v1396
  %v2286 = vpop.f32.mrf.mxu0
  %v2287 = vadd.f32 %v2174, %v2286
  %2288 = vmatmul.f32.gmra.mxu0 %v1404
  %v2289 = vpop.f32.mrf.mxu0
  %v2290 = vadd.f32 %v2177, %v2289
  %2291 = vmatmul.f32.gmra.mxu0 %v1412
  %v2292 = vpop.f32.mrf.mxu0
  %v2293 = vadd.f32 %v2180, %v2292
  %2294 = vmatmul.f32.gmra.mxu0 %v1420
  %v2295 = vpop.f32.mrf.mxu0
  %v2296 = vadd.f32 %v2183, %v2295
  %2297 = vmatmul.f32.gmra.mxu0 %v1428
  %v2298 = vpop.f32.mrf.mxu0
  %v2299 = vadd.f32 %v2186, %v2298
  %2300 = vdwg.mxu0
  %2301 = vmatpush.msra.mxu0 %v1158
  %2302 = vmatpush.msra.mxu0 %v1157
  %2303 = vmatpush.msra.mxu0 %v1156
  %2304 = vmatpush.msra.mxu0 %v1155
  %2305 = vmatpush.msra.mxu0 %v1154
  %2306 = vmatpush.msra.mxu0 %v1153
  %2307 = vmatpush.msra.mxu0 %v1152
  %2308 = vmatpush.msra.mxu0 %v1151
  %2309 = vmatpush.msra.mxu0 %v1150
  %2310 = vmatpush.msra.mxu0 %v1149
  %2311 = vmatpush.msra.mxu0 %v1148
  %2312 = vmatpush.msra.mxu0 %v1147
  %2313 = vmatpush.msra.mxu0 %v1146
  %2314 = vmatpush.msra.mxu0 %v1145
  %2315 = vmatpush.msra.mxu0 %v1144
  %2316 = vmatpush.msra.mxu0 %v1143
  %2317 = vmatmul.f32.gmra.mxu0 %v1181
  %v2318 = vpop.f32.mrf.mxu0
  %v2319 = vadd.f32 %v2206, %v2318
  %2320 = vmatmul.f32.gmra.mxu0 %v1189
  %v2321 = vpop.f32.mrf.mxu0
  %v2322 = vadd.f32 %v2209, %v2321
  %2323 = vmatmul.f32.gmra.mxu0 %v1197
  %v2324 = vpop.f32.mrf.mxu0
  %v2325 = vadd.f32 %v2212, %v2324
  %2326 = vmatmul.f32.gmra.mxu0 %v1205
  %v2327 = vpop.f32.mrf.mxu0
  %v2328 = vadd.f32 %v2215, %v2327
  %2329 = vmatmul.f32.gmra.mxu0 %v1213
  %v2330 = vpop.f32.mrf.mxu0
  %v2331 = vadd.f32 %v2218, %v2330
  %2332 = vmatmul.f32.gmra.mxu0 %v1221
  %v2333 = vpop.f32.mrf.mxu0
  %v2334 = vadd.f32 %v2221, %v2333
  %2335 = vmatmul.f32.gmra.mxu0 %v1229
  %v2336 = vpop.f32.mrf.mxu0
  %v2337 = vadd.f32 %v2224, %v2336
  %2338 = vmatmul.f32.gmra.mxu0 %v1237
  %v2339 = vpop.f32.mrf.mxu0
  %v2340 = vadd.f32 %v2227, %v2339
  %2341 = vmatmul.f32.gmra.mxu0 %v1245
  %v2342 = vpop.f32.mrf.mxu0
  %v2343 = vadd.f32 %v2230, %v2342
  %2344 = vmatmul.f32.gmra.mxu0 %v1253
  %v2345 = vpop.f32.mrf.mxu0
  %v2346 = vadd.f32 %v2233, %v2345
  %2347 = vmatmul.f32.gmra.mxu0 %v1261
  %v2348 = vpop.f32.mrf.mxu0
  %v2349 = vadd.f32 %v2236, %v2348
  %2350 = vmatmul.f32.gmra.mxu0 %v1269
  %v2351 = vpop.f32.mrf.mxu0
  %v2352 = vadd.f32 %v2239, %v2351
  %2353 = vmatmul.f32.gmra.mxu0 %v1277
  %v2354 = vpop.f32.mrf.mxu0
  %v2355 = vadd.f32 %v2242, %v2354
  %2356 = vmatmul.f32.gmra.mxu0 %v1285
  %v2357 = vpop.f32.mrf.mxu0
  %v2358 = vadd.f32 %v2245, %v2357
  %2359 = vmatmul.f32.gmra.mxu0 %v1293
  %v2360 = vpop.f32.mrf.mxu0
  %v2361 = vadd.f32 %v2248, %v2360
  %2362 = vmatmul.f32.gmra.mxu0 %v1301
  %v2363 = vpop.f32.mrf.mxu0
  %v2364 = vadd.f32 %v2251, %v2363
  %2365 = vmatmul.f32.gmra.mxu0 %v1309
  %v2366 = vpop.f32.mrf.mxu0
  %v2367 = vadd.f32 %v2254, %v2366
  %2368 = vmatmul.f32.gmra.mxu0 %v1317
  %v2369 = vpop.f32.mrf.mxu0
  %v2370 = vadd.f32 %v2257, %v2369
  %2371 = vmatmul.f32.gmra.mxu0 %v1325
  %v2372 = vpop.f32.mrf.mxu0
  %v2373 = vadd.f32 %v2260, %v2372
  %2374 = vmatmul.f32.gmra.mxu0 %v1333
  %v2375 = vpop.f32.mrf.mxu0
  %v2376 = vadd.f32 %v2263, %v2375
  %2377 = vmatmul.f32.gmra.mxu0 %v1341
  %v2378 = vpop.f32.mrf.mxu0
  %v2379 = vadd.f32 %v2266, %v2378
  %2380 = vmatmul.f32.gmra.mxu0 %v1349
  %v2381 = vpop.f32.mrf.mxu0
  %v2382 = vadd.f32 %v2269, %v2381
  %2383 = vmatmul.f32.gmra.mxu0 %v1357
  %v2384 = vpop.f32.mrf.mxu0
  %v2385 = vadd.f32 %v2272, %v2384
  %2386 = vmatmul.f32.gmra.mxu0 %v1365
  %v2387 = vpop.f32.mrf.mxu0
  %v2388 = vadd.f32 %v2275, %v2387
  %2389 = vmatmul.f32.gmra.mxu0 %v1373
  %v2390 = vpop.f32.mrf.mxu0
  %v2391 = vadd.f32 %v2278, %v2390
  %2392 = vmatmul.f32.gmra.mxu0 %v1381
  %v2393 = vpop.f32.mrf.mxu0
  %v2394 = vadd.f32 %v2281, %v2393
  %2395 = vmatmul.f32.gmra.mxu0 %v1389
  %v2396 = vpop.f32.mrf.mxu0
  %v2397 = vadd.f32 %v2284, %v2396
  %2398 = vmatmul.f32.gmra.mxu0 %v1397
  %v2399 = vpop.f32.mrf.mxu0
  %v2400 = vadd.f32 %v2287, %v2399
  %2401 = vmatmul.f32.gmra.mxu0 %v1405
  %v2402 = vpop.f32.mrf.mxu0
  %v2403 = vadd.f32 %v2290, %v2402
  %2404 = vmatmul.f32.gmra.mxu0 %v1413
  %v2405 = vpop.f32.mrf.mxu0
  %v2406 = vadd.f32 %v2293, %v2405
  %2407 = vmatmul.f32.gmra.mxu0 %v1421
  %v2408 = vpop.f32.mrf.mxu0
  %v2409 = vadd.f32 %v2296, %v2408
  %2410 = vmatmul.f32.gmra.mxu0 %v1429
  %v2411 = vpop.f32.mrf.mxu0
  %v2412 = vadd.f32 %v2299, %v2411
  %2413 = vdwg.mxu0
  %2414 = vmatpush.msra.mxu0 %v1174
  %2415 = vmatpush.msra.mxu0 %v1173
  %2416 = vmatpush.msra.mxu0 %v1172
  %2417 = vmatpush.msra.mxu0 %v1171
  %2418 = vmatpush.msra.mxu0 %v1170
  %2419 = vmatpush.msra.mxu0 %v1169
  %2420 = vmatpush.msra.mxu0 %v1168
  %2421 = vmatpush.msra.mxu0 %v1167
  %2422 = vmatpush.msra.mxu0 %v1166
  %2423 = vmatpush.msra.mxu0 %v1165
  %2424 = vmatpush.msra.mxu0 %v1164
  %2425 = vmatpush.msra.mxu0 %v1163
  %2426 = vmatpush.msra.mxu0 %v1162
  %2427 = vmatpush.msra.mxu0 %v1161
  %2428 = vmatpush.msra.mxu0 %v1160
  %2429 = vmatpush.msra.mxu0 %v1159
  %2430 = vmatmul.f32.gmra.mxu0 %v1182
  %v2431 = vpop.f32.mrf.mxu0
  %v2432 = vadd.f32 %v2319, %v2431
  %2433 = vmatmul.f32.gmra.mxu0 %v1190
  %v2434 = vpop.f32.mrf.mxu0
  %v2435 = vadd.f32 %v2322, %v2434
  %2436 = vmatmul.f32.gmra.mxu0 %v1198
  %v2437 = vpop.f32.mrf.mxu0
  %v2438 = vadd.f32 %v2325, %v2437
  %2439 = vmatmul.f32.gmra.mxu0 %v1206
  %v2440 = vpop.f32.mrf.mxu0
  %v2441 = vadd.f32 %v2328, %v2440
  %2442 = vmatmul.f32.gmra.mxu0 %v1214
  %v2443 = vpop.f32.mrf.mxu0
  %v2444 = vadd.f32 %v2331, %v2443
  %2445 = vmatmul.f32.gmra.mxu0 %v1222
  %v2446 = vpop.f32.mrf.mxu0
  %v2447 = vadd.f32 %v2334, %v2446
  %2448 = vmatmul.f32.gmra.mxu0 %v1230
  %v2449 = vpop.f32.mrf.mxu0
  %v2450 = vadd.f32 %v2337, %v2449
  %2451 = vmatmul.f32.gmra.mxu0 %v1238
  %v2452 = vpop.f32.mrf.mxu0
  %v2453 = vadd.f32 %v2340, %v2452
  %2454 = vmatmul.f32.gmra.mxu0 %v1246
  %v2455 = vpop.f32.mrf.mxu0
  %v2456 = vadd.f32 %v2343, %v2455
  %2457 = vmatmul.f32.gmra.mxu0 %v1254
  %v2458 = vpop.f32.mrf.mxu0
  %v2459 = vadd.f32 %v2346, %v2458
  %2460 = vmatmul.f32.gmra.mxu0 %v1262
  %v2461 = vpop.f32.mrf.mxu0
  %v2462 = vadd.f32 %v2349, %v2461
  %2463 = vmatmul.f32.gmra.mxu0 %v1270
  %v2464 = vpop.f32.mrf.mxu0
  %v2465 = vadd.f32 %v2352, %v2464
  %2466 = vmatmul.f32.gmra.mxu0 %v1278
  %v2467 = vpop.f32.mrf.mxu0
  %v2468 = vadd.f32 %v2355, %v2467
  %2469 = vmatmul.f32.gmra.mxu0 %v1286
  %v2470 = vpop.f32.mrf.mxu0
  %v2471 = vadd.f32 %v2358, %v2470
  %2472 = vmatmul.f32.gmra.mxu0 %v1294
  %v2473 = vpop.f32.mrf.mxu0
  %v2474 = vadd.f32 %v2361, %v2473
  %2475 = vmatmul.f32.gmra.mxu0 %v1302
  %v2476 = vpop.f32.mrf.mxu0
  %v2477 = vadd.f32 %v2364, %v2476
  %2478 = vmatmul.f32.gmra.mxu0 %v1310
  %v2479 = vpop.f32.mrf.mxu0
  %v2480 = vadd.f32 %v2367, %v2479
  %2481 = vmatmul.f32.gmra.mxu0 %v1318
  %v2482 = vpop.f32.mrf.mxu0
  %v2483 = vadd.f32 %v2370, %v2482
  %2484 = vmatmul.f32.gmra.mxu0 %v1326
  %v2485 = vpop.f32.mrf.mxu0
  %v2486 = vadd.f32 %v2373, %v2485
  %2487 = vmatmul.f32.gmra.mxu0 %v1334
  %v2488 = vpop.f32.mrf.mxu0
  %v2489 = vadd.f32 %v2376, %v2488
  %2490 = vmatmul.f32.gmra.mxu0 %v1342
  %v2491 = vpop.f32.mrf.mxu0
  %v2492 = vadd.f32 %v2379, %v2491
  %2493 = vmatmul.f32.gmra.mxu0 %v1350
  %v2494 = vpop.f32.mrf.mxu0
  %v2495 = vadd.f32 %v2382, %v2494
  %2496 = vmatmul.f32.gmra.mxu0 %v1358
  %v2497 = vpop.f32.mrf.mxu0
  %v2498 = vadd.f32 %v2385, %v2497
  %2499 = vmatmul.f32.gmra.mxu0 %v1366
  %v2500 = vpop.f32.mrf.mxu0
  %v2501 = vadd.f32 %v2388, %v2500
  %2502 = vmatmul.f32.gmra.mxu0 %v1374
  %v2503 = vpop.f32.mrf.mxu0
  %v2504 = vadd.f32 %v2391, %v2503
  %2505 = vmatmul.f32.gmra.mxu0 %v1382
  %v2506 = vpop.f32.mrf.mxu0
  %v2507 = vadd.f32 %v2394, %v2506
  %2508 = vmatmul.f32.gmra.mxu0 %v1390
  %v2509 = vpop.f32.mrf.mxu0
  %v2510 = vadd.f32 %v2397, %v2509
  %2511 = vmatmul.f32.gmra.mxu0 %v1398
  %v2512 = vpop.f32.mrf.mxu0
  %v2513 = vadd.f32 %v2400, %v2512
  %2514 = vmatmul.f32.gmra.mxu0 %v1406
  %v2515 = vpop.f32.mrf.mxu0
  %v2516 = vadd.f32 %v2403, %v2515
  %2517 = vmatmul.f32.gmra.mxu0 %v1414
  %v2518 = vpop.f32.mrf.mxu0
  %v2519 = vadd.f32 %v2406, %v2518
  %2520 = vmatmul.f32.gmra.mxu0 %v1422
  %v2521 = vpop.f32.mrf.mxu0
  %v2522 = vadd.f32 %v2409, %v2521
  %2523 = vmatmul.f32.gmra.mxu0 %v1430
  %v2524 = vpop.f32.mrf.mxu0
  %v2525 = vadd.f32 %v2412, %v2524
  %2526 = vdwg.mxu0
  %v2527 = vmax.f32 %v2432, 0.0
  %v2528 = vmax.f32 %v2435, 0.0
  %v2529 = vmax.f32 %v2438, 0.0
  %v2530 = vmax.f32 %v2441, 0.0
  %v2531 = vmax.f32 %v2444, 0.0
  %v2532 = vmax.f32 %v2447, 0.0
  %v2533 = vmax.f32 %v2450, 0.0
  %v2534 = vmax.f32 %v2453, 0.0
  %v2535 = vmax.f32 %v2456, 0.0
  %v2536 = vmax.f32 %v2459, 0.0
  %v2537 = vmax.f32 %v2462, 0.0
  %v2538 = vmax.f32 %v2465, 0.0
  %v2539 = vmax.f32 %v2468, 0.0
  %v2540 = vmax.f32 %v2471, 0.0
  %v2541 = vmax.f32 %v2474, 0.0
  %v2542 = vmax.f32 %v2477, 0.0
  %v2543 = vmax.f32 %v2480, 0.0
  %v2544 = vmax.f32 %v2483, 0.0
  %v2545 = vmax.f32 %v2486, 0.0
  %v2546 = vmax.f32 %v2489, 0.0
  %v2547 = vmax.f32 %v2492, 0.0
  %v2548 = vmax.f32 %v2495, 0.0
  %v2549 = vmax.f32 %v2498, 0.0
  %v2550 = vmax.f32 %v2501, 0.0
  %v2551 = vmax.f32 %v2504, 0.0
  %v2552 = vmax.f32 %v2507, 0.0
  %v2553 = vmax.f32 %v2510, 0.0
  %v2554 = vmax.f32 %v2513, 0.0
  %v2555 = vmax.f32 %v2516, 0.0
  %v2556 = vmax.f32 %v2519, 0.0
  %v2557 = vmax.f32 %v2522, 0.0
  %v2558 = vmax.f32 %v2525, 0.0
  %v2559 = vld [vmem:[%s4] sm:$0xff]
  %v2560 = vld [vmem:[%s4 + $0x8] sm:$0xff]
  %v2561 = vld [vmem:[%s5] sm:$0xff]
  %2563 = vset.pattern.permute.xlu0 0
  %2564 = vperm.xlu0 %2563, %v2561
  %v2565 = vpop.permute.xlu0 %2564
  %2567 = vmatpush.msra.mxu0 %v2542
  %2568 = vmatpush.msra.mxu0 %v2541
  %2569 = vmatpush.msra.mxu0 %v2540
  %2570 = vmatpush.msra.mxu0 %v2539
  %2571 = vmatpush.msra.mxu0 %v2538
  %2572 = vmatpush.msra.mxu0 %v2537
  %2573 = vmatpush.msra.mxu0 %v2536
  %2574 = vmatpush.msra.mxu0 %v2535
  %2575 = vmatpush.msra.mxu0 %v2534
  %2576 = vmatpush.msra.mxu0 %v2533
  %2577 = vmatpush.msra.mxu0 %v2532
  %2578 = vmatpush.msra.mxu0 %v2531
  %2579 = vmatpush.msra.mxu0 %v2530
  %2580 = vmatpush.msra.mxu0 %v2529
  %2581 = vmatpush.msra.mxu0 %v2528
  %2582 = vmatpush.msra.mxu0 %v2527
  %2583 = vmatmul.f32.gmra.mxu0 %v2559
  %v2584 = vpop.f32.mrf.mxu0
  %v2585 = vadd.f32 %v2565, %v2584
  %2586 = vdwg.mxu0
  %2587 = vmatpush.msra.mxu0 %v2558
  %2588 = vmatpush.msra.mxu0 %v2557
  %2589 = vmatpush.msra.mxu0 %v2556
  %2590 = vmatpush.msra.mxu0 %v2555
  %2591 = vmatpush.msra.mxu0 %v2554
  %2592 = vmatpush.msra.mxu0 %v2553
  %2593 = vmatpush.msra.mxu0 %v2552
  %2594 = vmatpush.msra.mxu0 %v2551
  %2595 = vmatpush.msra.mxu0 %v2550
  %2596 = vmatpush.msra.mxu0 %v2549
  %2597 = vmatpush.msra.mxu0 %v2548
  %2598 = vmatpush.msra.mxu0 %v2547
  %2599 = vmatpush.msra.mxu0 %v2546
  %2600 = vmatpush.msra.mxu0 %v2545
  %2601 = vmatpush.msra.mxu0 %v2544
  %2602 = vmatpush.msra.mxu0 %v2543
  %2603 = vmatmul.f32.gmra.mxu0 %v2560
  %v2604 = vpop.f32.mrf.mxu0
  %v2605 = vadd.f32 %v2585, %v2604
  %2606 = vdwg.mxu0
  %vm2607 = vcmask 31744
  %2608 = vst.msk [vmem:[%s6] sm:$0xff] %vm2607, %v2605
  // Predicated region
  $region26: #{tpu_custom_call.1} parent=0 // pred_check
    _
  $region27: #{tpu_custom_call.1} parent=0 // pred_check_branch
    %2610 = sbr.rel (0) target = $region29
  $region28: #{tpu_custom_call.1} parent=0 // pred_region
    _
  $region29: #{tpu_custom_call.1} parent=0 // pred_fallthru
    _
  // Predicated region
  $region30: #{tpu_custom_call.1} parent=0 // pred_check
    _
  $region31: #{tpu_custom_call.1} parent=0 // pred_check_branch
    %2612 = sbr.rel (0) target = $region33
  $region32: #{tpu_custom_call.1} parent=0 // pred_region
    _
  $region33: #{tpu_custom_call.1} parent=0 // pred_fallthru
    _

</llo_original>
